<compile_context>
chip_gen: v6e
topology: v6e:2x2x1
jax: 0.10.0
libtpu: 0.0.40
codegen_flags: <defaults>
</compile_context>

<pallas_src>
import functools

import jax
import jax.numpy as jnp
from jax.experimental import pallas as pl
from jax.experimental.pallas import tpu as pltpu


BACKBONE_DIM = 128      # self.backbone_dim
BACKBONE_DIM2 = 128     # self.backbone_dim2
FEATURES_DIM = 128      # features_dim


def _vmem_budgets():
    """(tile_budget_bytes, vmem_limit_bytes), generation-aware.

    v7x has 64 MiB VMEM per TensorCore -> conservative numbers; v5e/v6e have
    128 MiB -> bigger tiles amortize the ~0.35 us/grid-step overhead."""
    cap = 64 * 1024 * 1024
    try:
        info = pltpu.get_tpu_info()
        cap = int(getattr(info, "vmem_capacity_bytes", cap))
    except Exception:
        pass  # fall back to v7x-safe numbers (safe on every generation)
    if cap >= 100 * 1024 * 1024:                    # v5e / v6e (128 MiB VMEM)
        return 44 * 1024 * 1024, 100 * 1024 * 1024
    return 16 * 1024 * 1024, 48 * 1024 * 1024       # v7x (64 MiB VMEM)


def _pick_hw_tile(HW, C, tile_budget):
    """Multiple-of-128 spatial tile T.  HW is padded up to a multiple of T in
    the wrapper, so T no longer has to divide HW exactly."""
    # double-buffered per-lane bytes: x column (C, bf16) + conv column (128, bf16)
    per_lane = 2 * 2 * (BACKBONE_DIM + C)
    cap = max(128, (tile_budget // per_lane) // 128 * 128)
    hw_up = -(-HW // 128) * 128
    return min(cap, hw_up)


# ---------------------------------------------------------------------------
# Fused kernel: synthetic backbone (1x1 conv + ReLU + global-avg-pool) and the
# contrastive MLP head + L2 normalize (run once per batch on the last HW tile).
# ---------------------------------------------------------------------------
def _fused_kernel(hw_total, n_pad, x_ref, wcT_ref, bc_ref, w1T_ref, b1_ref,
                  w2T_ref, b2_ref, conv_ref, pool_ref, out_ref, pool_acc):
    # x_ref:    (1, C, T)    bf16  channels-first slice of the (padded) input
    # wcT_ref:  (128, C)     bf16
    # bc_ref:   (128, 1)     f32
    # w1T_ref:  (128, 128)   bf16  (out x in)
    # b1_ref:   (128, 1)     f32
    # w2T_ref:  (128, 128)   bf16  (out x in)
    # b2_ref:   (128, 1)     f32
    # conv_ref: (1, 128, T)  bf16  already NCHW-flat layout
    # pool_ref: (1, 128, 1)  f32
    # out_ref:  (1, 128, 1)  f32
    # pool_acc: (128, 1)     f32   per-batch running spatial sum
    t_idx = pl.program_id(1)
    n_t = pl.num_programs(1)

    @pl.when(t_idx == 0)
    def _init():
        pool_acc[...] = jnp.zeros_like(pool_acc)

    # 1x1 conv as a channels-first matmul on the MXU (bf16 operands, f32 acc).
    feat = jnp.dot(wcT_ref[...], x_ref[0],
                   preferred_element_type=jnp.float32)          # (128, T) f32
    feat = jnp.maximum(feat + bc_ref[...], 0.0)                 # bias + ReLU (f32 VPU)
    conv_ref[0] = feat.astype(jnp.bfloat16)                     # bf16, lane-dense store
    pool_acc[...] += jnp.sum(feat, axis=-1, keepdims=True)      # (128, 1) f32

    @pl.when(t_idx == n_t - 1)
    def _finalize():
        pool_sum = pool_acc[...]
        if n_pad:   # static: each padded (zero) x column contributes exactly relu(bc)
            pool_sum = pool_sum - float(n_pad) * jnp.maximum(bc_ref[...], 0.0)
        pool = pool_sum * (1.0 / hw_total)                      # (128, 1) f32
        pool_ref[0] = pool

        # Contrastive head: column-oriented decode-shape MXU matmuls (N = 1).
        h = jnp.dot(w1T_ref[...], pool.astype(jnp.bfloat16),
                    preferred_element_type=jnp.float32)         # (128, 1)
        h = jnp.maximum(h + b1_ref[...], 0.0)
        o = jnp.dot(w2T_ref[...], h.astype(jnp.bfloat16),
                    preferred_element_type=jnp.float32)         # (128, 1)
        o = o + b2_ref[...]
        # F.normalize(dim=-1): x / max(||x||, 1e-12) == x * rsqrt(max(||x||^2, 1e-24))
        sumsq = jnp.sum(o * o, axis=0, keepdims=True)
        out_ref[0] = o * jax.lax.rsqrt(jnp.maximum(sumsq, 1e-24))


def spatial_model_vis_forward(params, x, i):
    # `i` is an opaque index forwarded to the (external) backbone; the
    # synthetic backbone does not use it.
    del i
    B, C, H, W = x.shape
    HW = H * W
    tile_budget, vmem_limit = _vmem_budgets()
    T = _pick_hw_tile(HW, C, tile_budget)
    n_t = -(-HW // T)
    HW_pad = n_t * T
    n_pad = HW_pad - HW

    # free reshape (no transpose); bf16 halves the input DMA stream
    x_c = x.reshape(B, C, HW).astype(jnp.bfloat16)
    if n_pad:
        x_c = jnp.pad(x_c, ((0, 0), (0, 0), (0, n_pad)))

    wcT = jnp.transpose(params["wc"]).astype(jnp.bfloat16)      # (128, C)
    bc = params["bc"].reshape(BACKBONE_DIM, 1)
    w1T = jnp.transpose(params["w1"]).astype(jnp.bfloat16)      # (out, in)
    b1 = params["b1"].reshape(BACKBONE_DIM2, 1)
    w2T = jnp.transpose(params["w2"]).astype(jnp.bfloat16)      # (out, in)
    b2 = params["b2"].reshape(FEATURES_DIM, 1)

    kernel = functools.partial(_fused_kernel, float(HW), int(n_pad))

    conv_flat, pool, out = pl.pallas_call(
        kernel,
        out_shape=(
            jax.ShapeDtypeStruct((B, BACKBONE_DIM, HW_pad), jnp.bfloat16),
            jax.ShapeDtypeStruct((B, BACKBONE_DIM, 1), jnp.float32),
            jax.ShapeDtypeStruct((B, FEATURES_DIM, 1), jnp.float32),
        ),
        grid_spec=pltpu.PrefetchScalarGridSpec(
            num_scalar_prefetch=0,
            grid=(B, n_t),                                      # HW (reduction) axis last
            in_specs=[
                pl.BlockSpec((1, C, T), lambda b, t: (b, 0, t)),
                pl.BlockSpec((BACKBONE_DIM, C), lambda b, t: (0, 0)),
                pl.BlockSpec((BACKBONE_DIM, 1), lambda b, t: (0, 0)),
                pl.BlockSpec((BACKBONE_DIM2, BACKBONE_DIM), lambda b, t: (0, 0)),
                pl.BlockSpec((BACKBONE_DIM2, 1), lambda b, t: (0, 0)),
                pl.BlockSpec((FEATURES_DIM, BACKBONE_DIM2), lambda b, t: (0, 0)),
                pl.BlockSpec((FEATURES_DIM, 1), lambda b, t: (0, 0)),
            ],
            out_specs=[
                pl.BlockSpec((1, BACKBONE_DIM, T), lambda b, t: (b, 0, t)),
                pl.BlockSpec((1, BACKBONE_DIM, 1), lambda b, t: (b, 0, 0)),
                pl.BlockSpec((1, FEATURES_DIM, 1), lambda b, t: (b, 0, 0)),
            ],
            scratch_shapes=[pltpu.VMEM((BACKBONE_DIM, 1), jnp.float32)],
        ),
        compiler_params=pltpu.CompilerParams(
            # batch axis "parallel" feeds both v7x TensorCores when B >= 2;
            # TODO(synk): for B == 1 on v7x, split the HW axis across the two
            # cores with partial pool sums and an epilogue combine.
            dimension_semantics=("parallel", "arbitrary"),
            vmem_limit_bytes=vmem_limit,
        ),
    )(x_c, wcT, bc, w1T, b1, w2T, b2)

    if n_pad:
        conv_flat = conv_flat[:, :, :HW]
    conv_features = conv_flat.reshape(B, BACKBONE_DIM, H, W)    # already NCHW layout
    pool_feature = pool.reshape(B, BACKBONE_DIM)
    out = out.reshape(B, FEATURES_DIM)
    return conv_features, pool_feature, out


def init_params(key, in_channels):
    k = jax.random.split(key, 6)
    scale = 0.05
    return {
        # synthetic backbone 1x1 conv
        "wc": scale * jax.random.normal(k[0], (in_channels, BACKBONE_DIM),
                                        jnp.float32),
        "bc": scale * jax.random.normal(k[1], (1, BACKBONE_DIM), jnp.float32),
        # contrastive_head: Linear(128,128) -> ReLU -> Linear(128,128)
        "w1": scale * jax.random.normal(k[2], (BACKBONE_DIM, BACKBONE_DIM2),
                                        jnp.float32),
        "b1": scale * jax.random.normal(k[3], (1, BACKBONE_DIM2), jnp.float32),
        "w2": scale * jax.random.normal(k[4], (BACKBONE_DIM2, FEATURES_DIM),
                                        jnp.float32),
        "b2": scale * jax.random.normal(k[5], (1, FEATURES_DIM), jnp.float32),
    }


def _reference(params, x):
    """Pure-JAX reference mirroring the kernel's precision choices."""
    B, C, H, W = x.shape
    HW = H * W
    xc = x.reshape(B, C, HW).astype(jnp.bfloat16)
    wcT = params["wc"].T.astype(jnp.bfloat16)
    feat = jnp.einsum("dc,bcs->bds", wcT, xc,
                      preferred_element_type=jnp.float32)       # (B, 128, HW) f32
    feat = jnp.maximum(feat + params["bc"].reshape(1, BACKBONE_DIM, 1), 0.0)
    conv = feat.astype(jnp.bfloat16).reshape(B, BACKBONE_DIM, H, W)
    pool = jnp.mean(feat, axis=-1)                              # (B, 128) f32
    w1b = params["w1"].astype(jnp.bfloat16)
    w2b = params["w2"].astype(jnp.bfloat16)
    h = jnp.dot(pool.astype(jnp.bfloat16), w1b,
                preferred_element_type=jnp.float32) + params["b1"]
    h = jnp.maximum(h, 0.0)
    o = jnp.dot(h.astype(jnp.bfloat16), w2b,
                preferred_element_type=jnp.float32) + params["b2"]
    n2 = jnp.sum(o * o, axis=-1, keepdims=True)
    out = o * jax.lax.rsqrt(jnp.maximum(n2, 1e-24))
    return conv, pool, out


if __name__ == "__main__":
    key = jax.random.PRNGKey(0)
    kx, kp = jax.random.split(key)

    B, C, H, W = 2, 4, 16, 16                 # small NCHW input
    x = jax.random.normal(kx, (B, C, H, W), jnp.float32)
    params = init_params(kp, C)

    fwd = jax.jit(functools.partial(spatial_model_vis_forward, params))
    conv_features, pool_feature, out = fwd(x, 0)
    jax.block_until_ready((conv_features, pool_feature, out))

    # sanity check against pure-JAX reference
    conv_r, pool_r, out_r = _reference(params, x)
    assert conv_features.shape == (B, BACKBONE_DIM, H, W)
    assert conv_features.dtype == jnp.bfloat16
    assert pool_feature.shape == (B, BACKBONE_DIM)
    assert out.shape == (B, FEATURES_DIM)
    assert jnp.allclose(conv_features.astype(jnp.float32),
                        conv_r.astype(jnp.float32), atol=2e-2, rtol=2e-2)
    assert jnp.allclose(pool_feature, pool_r, atol=2e-3, rtol=2e-3)
    assert jnp.allclose(out, out_r, atol=2e-2, rtol=2e-2)

    print("KERNEL_OK")
</pallas_src>

<mosaic_0001>
module attributes {stable_mosaic.version = 11 : i64} {
  func.func @_fused_kernel(%arg0: i32, %arg1: i32, %arg2: memref<1x4x256xbf16, #tpu.memory_space<vmem>>, %arg3: memref<128x4xbf16, #tpu.memory_space<vmem>>, %arg4: memref<128x1xf32, #tpu.memory_space<vmem>>, %arg5: memref<128x128xbf16, #tpu.memory_space<vmem>>, %arg6: memref<128x1xf32, #tpu.memory_space<vmem>>, %arg7: memref<128x128xbf16, #tpu.memory_space<vmem>>, %arg8: memref<128x1xf32, #tpu.memory_space<vmem>>, %arg9: memref<1x128x256xbf16, #tpu.memory_space<vmem>>, %arg10: memref<1x128x1xf32, #tpu.memory_space<vmem>>, %arg11: memref<1x128x1xf32, #tpu.memory_space<vmem>>, %arg12: memref<128x1xf32, #tpu.memory_space<vmem>>) attributes {dimension_semantics = [#tpu.dimension_semantics<parallel>, #tpu.dimension_semantics<arbitrary>], iteration_bounds = array<i64: 2, 1>, scalar_prefetch = 0 : i64, scratch_operands = 1 : i64, tpu.core_type = #tpu.core_type<tc>, window_params = [{transform_indices = @transform_0, window_bounds = array<i64: 1, 4, 256>}, {pipeline_mode = #tpu.pipeline_mode<synchronous>, transform_indices = @transform_1, window_bounds = array<i64: 128, 4>}, {pipeline_mode = #tpu.pipeline_mode<synchronous>, transform_indices = @transform_2, window_bounds = array<i64: 128, 1>}, {pipeline_mode = #tpu.pipeline_mode<synchronous>, transform_indices = @transform_3, window_bounds = array<i64: 128, 128>}, {pipeline_mode = #tpu.pipeline_mode<synchronous>, transform_indices = @transform_4, window_bounds = array<i64: 128, 1>}, {pipeline_mode = #tpu.pipeline_mode<synchronous>, transform_indices = @transform_5, window_bounds = array<i64: 128, 128>}, {pipeline_mode = #tpu.pipeline_mode<synchronous>, transform_indices = @transform_6, window_bounds = array<i64: 128, 1>}, {transform_indices = @transform_7, window_bounds = array<i64: 1, 128, 256>}, {transform_indices = @transform_8, window_bounds = array<i64: 1, 128, 1>}, {transform_indices = @transform_9, window_bounds = array<i64: 1, 128, 1>}]} {
    %c0_i32 = arith.constant 0 : i32
    %0 = arith.cmpi eq, %arg1, %c0_i32 : i32
    %1 = arith.extui %0 : i1 to i32
    %c0_i32_0 = arith.constant 0 : i32
    %2 = arith.cmpi ne, %1, %c0_i32_0 : i32
    scf.if %2 {
      %cst_18 = arith.constant 0.000000e+00 : f32
      %24 = vector.broadcast %cst_18 : f32 to vector<128x1xf32>
      %c0_19 = arith.constant 0 : index
      %c0_20 = arith.constant 0 : index
      %25 = vector.load %arg12[%c0_19, %c0_20] : memref<128x1xf32, #tpu.memory_space<vmem>>, vector<128x1xf32>
      tpu.vector_store %arg12[%c0_19, %c0_20], %24 {strides = array<i32>} : memref<128x1xf32, #tpu.memory_space<vmem>>, vector<128x1xf32>,
    } else {
    }
    %c0 = arith.constant 0 : index
    %c0_1 = arith.constant 0 : index
    %3 = vector.load %arg3[%c0, %c0_1] : memref<128x4xbf16, #tpu.memory_space<vmem>>, vector<128x4xbf16>
    %c0_2 = arith.constant 0 : index
    %c0_3 = arith.constant 0 : index
    %c0_4 = arith.constant 0 : index
    %4 = vector.load %arg2[%c0_2, %c0_3, %c0_4] : memref<1x4x256xbf16, #tpu.memory_space<vmem>>, vector<1x4x256xbf16>
    %5 = vector.shape_cast %4 : vector<1x4x256xbf16> to vector<4x256xbf16>
    %cst = arith.constant dense<0.000000e+00> : vector<128x256xf32>
    %6 = tpu.matmul %3, %5, %cst {dimension_numbers = #tpu.dot_dimension_numbers<[1], [0], [0], [1], [0, 0, 1, 1], [], []>} : vector<128x4xbf16>, vector<4x256xbf16>, vector<128x256xf32> -> vector<128x256xf32>
    %c0_5 = arith.constant 0 : index
    %c0_6 = arith.constant 0 : index
    %7 = vector.load %arg4[%c0_5, %c0_6] : memref<128x1xf32, #tpu.memory_space<vmem>>, vector<128x1xf32>
    %8 = vector.broadcast %7 : vector<128x1xf32> to vector<128x256xf32>
    %9 = arith.addf %6, %8 : vector<128x256xf32>
    %cst_7 = arith.constant 0.000000e+00 : f32
    %10 = vector.broadcast %cst_7 : f32 to vector<128x256xf32>
    %11 = arith.maximumf %9, %10 : vector<128x256xf32>
    %12 = arith.truncf %11 : vector<128x256xf32> to vector<128x256xbf16>
    %c0_8 = arith.constant 0 : index
    %c0_9 = arith.constant 0 : index
    %c0_10 = arith.constant 0 : index
    %13 = vector.load %arg9[%c0_8, %c0_9, %c0_10] : memref<1x128x256xbf16, #tpu.memory_space<vmem>>, vector<1x128x256xbf16>
    %14 = vector.shape_cast %13 : vector<1x128x256xbf16> to vector<128x256xbf16>
    %15 = vector.shape_cast %12 : vector<128x256xbf16> to vector<1x128x256xbf16>
    tpu.vector_store %arg9[%c0_8, %c0_9, %c0_10], %15 {strides = array<i32>} : memref<1x128x256xbf16, #tpu.memory_space<vmem>>, vector<1x128x256xbf16>,
    %c0_11 = arith.constant 0 : index
    %c0_12 = arith.constant 0 : index
    %16 = vector.load %arg12[%c0_11, %c0_12] : memref<128x1xf32, #tpu.memory_space<vmem>>, vector<128x1xf32>
    %cst_13 = arith.constant dense<0.000000e+00> : vector<128xf32>
    %17 = vector.multi_reduction <add>, %11, %cst_13 [1] : vector<128x256xf32> to vector<128xf32>
    %18 = vector.shape_cast %17 : vector<128xf32> to vector<128x1xf32>
    %19 = arith.addf %16, %18 : vector<128x1xf32>
    %c0_14 = arith.constant 0 : index
    %c0_15 = arith.constant 0 : index
    %20 = vector.load %arg12[%c0_14, %c0_15] : memref<128x1xf32, #tpu.memory_space<vmem>>, vector<128x1xf32>
    tpu.vector_store %arg12[%c0_14, %c0_15], %19 {strides = array<i32>} : memref<128x1xf32, #tpu.memory_space<vmem>>, vector<128x1xf32>,
    %c0_i32_16 = arith.constant 0 : i32
    %21 = arith.cmpi eq, %arg1, %c0_i32_16 : i32
    %22 = arith.extui %21 : i1 to i32
    %c0_i32_17 = arith.constant 0 : i32
    %23 = arith.cmpi ne, %22, %c0_i32_17 : i32
    scf.if %23 {
      %c0_18 = arith.constant 0 : index
      %c0_19 = arith.constant 0 : index
      %24 = vector.load %arg12[%c0_18, %c0_19] : memref<128x1xf32, #tpu.memory_space<vmem>>, vector<128x1xf32>
      %cst_20 = arith.constant 3.906250e-03 : f32
      %25 = vector.broadcast %cst_20 : f32 to vector<128x1xf32>
      %26 = arith.mulf %24, %25 : vector<128x1xf32>
      %c0_21 = arith.constant 0 : index
      %c0_22 = arith.constant 0 : index
      %c0_23 = arith.constant 0 : index
      %27 = vector.load %arg10[%c0_21, %c0_22, %c0_23] : memref<1x128x1xf32, #tpu.memory_space<vmem>>, vector<1x128x1xf32>
      %28 = vector.shape_cast %27 : vector<1x128x1xf32> to vector<128x1xf32>
      %29 = vector.shape_cast %26 : vector<128x1xf32> to vector<1x128x1xf32>
      tpu.vector_store %arg10[%c0_21, %c0_22, %c0_23], %29 {strides = array<i32>} : memref<1x128x1xf32, #tpu.memory_space<vmem>>, vector<1x128x1xf32>,
      %c0_24 = arith.constant 0 : index
      %c0_25 = arith.constant 0 : index
      %30 = vector.load %arg5[%c0_24, %c0_25] : memref<128x128xbf16, #tpu.memory_space<vmem>>, vector<128x128xbf16>
      %31 = arith.truncf %26 : vector<128x1xf32> to vector<128x1xbf16>
      %cst_26 = arith.constant dense<0.000000e+00> : vector<128x1xf32>
      %32 = tpu.matmul %30, %31, %cst_26 {dimension_numbers = #tpu.dot_dimension_numbers<[1], [0], [0], [1], [0, 0, 1, 1], [], []>} : vector<128x128xbf16>, vector<128x1xbf16>, vector<128x1xf32> -> vector<128x1xf32>
      %c0_27 = arith.constant 0 : index
      %c0_28 = arith.constant 0 : index
      %33 = vector.load %arg6[%c0_27, %c0_28] : memref<128x1xf32, #tpu.memory_space<vmem>>, vector<128x1xf32>
      %34 = arith.addf %32, %33 : vector<128x1xf32>
      %cst_29 = arith.constant 0.000000e+00 : f32
      %35 = vector.broadcast %cst_29 : f32 to vector<128x1xf32>
      %36 = arith.maximumf %34, %35 : vector<128x1xf32>
      %c0_30 = arith.constant 0 : index
      %c0_31 = arith.constant 0 : index
      %37 = vector.load %arg7[%c0_30, %c0_31] : memref<128x128xbf16, #tpu.memory_space<vmem>>, vector<128x128xbf16>
      %38 = arith.truncf %36 : vector<128x1xf32> to vector<128x1xbf16>
      %cst_32 = arith.constant dense<0.000000e+00> : vector<128x1xf32>
      %39 = tpu.matmul %37, %38, %cst_32 {dimension_numbers = #tpu.dot_dimension_numbers<[1], [0], [0], [1], [0, 0, 1, 1], [], []>} : vector<128x128xbf16>, vector<128x1xbf16>, vector<128x1xf32> -> vector<128x1xf32>
      %c0_33 = arith.constant 0 : index
      %c0_34 = arith.constant 0 : index
      %40 = vector.load %arg8[%c0_33, %c0_34] : memref<128x1xf32, #tpu.memory_space<vmem>>, vector<128x1xf32>
      %41 = arith.addf %39, %40 : vector<128x1xf32>
      %42 = arith.mulf %41, %41 : vector<128x1xf32>
      %cst_35 = arith.constant dense<0.000000e+00> : vector<1xf32>
      %43 = vector.multi_reduction <add>, %42, %cst_35 [0] : vector<128x1xf32> to vector<1xf32>
      %44 = vector.shape_cast %43 : vector<1xf32> to vector<1x1xf32>
      %cst_36 = arith.constant 1.000000e-24 : f32
      %45 = vector.broadcast %cst_36 : f32 to vector<1x1xf32>
      %46 = arith.maximumf %44, %45 : vector<1x1xf32>
      %47 = math.rsqrt %46 : vector<1x1xf32>
      %48 = vector.broadcast %47 : vector<1x1xf32> to vector<128x1xf32>
      %49 = arith.mulf %41, %48 : vector<128x1xf32>
      %c0_37 = arith.constant 0 : index
      %c0_38 = arith.constant 0 : index
      %c0_39 = arith.constant 0 : index
      %50 = vector.load %arg11[%c0_37, %c0_38, %c0_39] : memref<1x128x1xf32, #tpu.memory_space<vmem>>, vector<1x128x1xf32>
      %51 = vector.shape_cast %50 : vector<1x128x1xf32> to vector<128x1xf32>
      %52 = vector.shape_cast %49 : vector<128x1xf32> to vector<1x128x1xf32>
      tpu.vector_store %arg11[%c0_37, %c0_38, %c0_39], %52 {strides = array<i32>} : memref<1x128x1xf32, #tpu.memory_space<vmem>>, vector<1x128x1xf32>,
    } else {
    }
    return
  }
  func.func @transform_0(%arg0: i32, %arg1: i32) -> (i32, i32, i32) {
    %c0_i32 = arith.constant 0 : i32
    %c0_i32_0 = arith.constant 0 : i32
    return %arg0, %c0_i32, %arg1 : i32, i32, i32
  }
  func.func @transform_1(%arg0: i32, %arg1: i32) -> (i32, i32) {
    %c0_i32 = arith.constant 0 : i32
    %c0_i32_0 = arith.constant 0 : i32
    %c0_i32_1 = arith.constant 0 : i32
    return %c0_i32, %c0_i32_0 : i32, i32
  }
  func.func @transform_2(%arg0: i32, %arg1: i32) -> (i32, i32) {
    %c0_i32 = arith.constant 0 : i32
    %c0_i32_0 = arith.constant 0 : i32
    %c0_i32_1 = arith.constant 0 : i32
    return %c0_i32, %c0_i32_0 : i32, i32
  }
  func.func @transform_3(%arg0: i32, %arg1: i32) -> (i32, i32) {
    %c0_i32 = arith.constant 0 : i32
    %c0_i32_0 = arith.constant 0 : i32
    %c0_i32_1 = arith.constant 0 : i32
    return %c0_i32, %c0_i32_0 : i32, i32
  }
  func.func @transform_4(%arg0: i32, %arg1: i32) -> (i32, i32) {
    %c0_i32 = arith.constant 0 : i32
    %c0_i32_0 = arith.constant 0 : i32
    %c0_i32_1 = arith.constant 0 : i32
    return %c0_i32, %c0_i32_0 : i32, i32
  }
  func.func @transform_5(%arg0: i32, %arg1: i32) -> (i32, i32) {
    %c0_i32 = arith.constant 0 : i32
    %c0_i32_0 = arith.constant 0 : i32
    %c0_i32_1 = arith.constant 0 : i32
    return %c0_i32, %c0_i32_0 : i32, i32
  }
  func.func @transform_6(%arg0: i32, %arg1: i32) -> (i32, i32) {
    %c0_i32 = arith.constant 0 : i32
    %c0_i32_0 = arith.constant 0 : i32
    %c0_i32_1 = arith.constant 0 : i32
    return %c0_i32, %c0_i32_0 : i32, i32
  }
  func.func @transform_7(%arg0: i32, %arg1: i32) -> (i32, i32, i32) {
    %c0_i32 = arith.constant 0 : i32
    %c0_i32_0 = arith.constant 0 : i32
    return %arg0, %c0_i32, %arg1 : i32, i32, i32
  }
  func.func @transform_8(%arg0: i32, %arg1: i32) -> (i32, i32, i32) {
    %c0_i32 = arith.constant 0 : i32
    %c0_i32_0 = arith.constant 0 : i32
    %c0_i32_1 = arith.constant 0 : i32
    return %arg0, %c0_i32, %c0_i32_0 : i32, i32, i32
  }
  func.func @transform_9(%arg0: i32, %arg1: i32) -> (i32, i32, i32) {
    %c0_i32 = arith.constant 0 : i32
    %c0_i32_0 = arith.constant 0 : i32
    %c0_i32_1 = arith.constant 0 : i32
    return %arg0, %c0_i32, %c0_i32_0 : i32, i32, i32
  }
}

</mosaic_0001>

<llo_original>
// kernel: spatial_model_vis_forward.1
$region0: #{spatial_model_vis_forward.1}
  #allocation0 [shape = 'u32[]', space=smem, size = 0x4, offset = 0x4, fixed_abs, tag = 'smem constant byte address 0x4 - core index']
  #allocation1 [shape = 'u32[144,128]{1,0:T(1,128)}', space=vmem, size = 0x12000, scoped, tag = 'internal scratch']
  #allocation2 [shape = 'f32[128,1]{1,0:T(8,128)}', space=vmem, size = 0x10000, scoped, tag = 'scratch operand']
  %s0 = inlined_call_operand.vmem [shape: bf16[2,4,256], index: 0, kind: input, shape index: {}]
  %s1 = inlined_call_operand.hbm [shape: bf16[128,4], index: 1, kind: input, shape index: {}]
  %s2 = inlined_call_operand.vmem [shape: f32[128,1], index: 2, kind: input, shape index: {}]
  %s3 = inlined_call_operand.hbm [shape: bf16[128,128], index: 3, kind: input, shape index: {}]
  %s4 = inlined_call_operand.vmem [shape: f32[128,1], index: 4, kind: input, shape index: {}]
  %s5 = inlined_call_operand.hbm [shape: bf16[128,128], index: 5, kind: input, shape index: {}]
  %s6 = inlined_call_operand.hbm [shape: f32[128,1], index: 6, kind: input, shape index: {}]
  %s7 = inlined_call_operand.vmem [shape: bf16[2,128,256], index: 7, kind: output, shape index: {0}]
  %s8 = inlined_call_operand.vmem [shape: f32[2,128,1], index: 8, kind: output, shape index: {1}]
  %s9 = inlined_call_operand.vmem [shape: f32[2,128,1], index: 9, kind: output, shape index: {2}]
  %10 = xla_tuple %s7, %s8, %s9
  %s11 = sld [smem:[#allocation0]]
  $region101: #{spatial_model_vis_forward.1} parent=0
    _
  %s13 = ssub.s32 1, %s11
  %s14 = scalar_select 0, %s13, %s11
  $region1: #{spatial_model_vis_forward.1} parent=0
    #allocation3 [shape = 'u8[32768]{0}', space=vmem, size = 0x8000, scoped, tag = 'input window, operand 1, single buffered']
    #allocation4 [shape = 's32[2]{0}', space=sflag, size = 0x8, scoped, tag = 'scoped memory for spatial_model_vis_forward.1']
    #allocation5 [shape = 'u8[32768]{0}', space=vmem, size = 0x8000, scoped, tag = 'input window, operand 3, single buffered']
    #allocation6 [shape = 's32[1]{0}', space=sflag, size = 0x4, scoped, tag = 'scoped memory for spatial_model_vis_forward.1']
    #allocation7 [shape = 'u8[32768]{0}', space=vmem, size = 0x8000, scoped, tag = 'input window, operand 5, single buffered']
    #allocation8 [shape = 'u8[65536]{0}', space=vmem, size = 0x10000, scoped, tag = 'input window, operand 6, single buffered']
    #allocation9 [shape = 's32[1]{0}', space=sflag, size = 0x4, scoped, tag = 'scoped memory for spatial_model_vis_forward.1']
    %15 = vsyncpa [#allocation4], 0
    %16 = vsyncpa [#allocation6], 0
    %17 = vsyncpa [#allocation9], 0
    loop: start=0, step=1, limit=4
    $region2: #{spatial_model_vis_forward.1} parent=1 // loop_pre_header
      _
    $region3: #{spatial_model_vis_forward.1} parent=1 // loop_header
      %s19 = sphi 0, %s23
      %p20 = scmp.ge.s32.totalorder %s19, 4
      %s26 = sphi 0, %s38
      %s27 = sphi 0, %s34
      %s28 = sphi 0, %s26
      %s29 = sphi 0, %s27
      %s30 = sphi 0, %s28
      %s31 = sphi 0, %s29
      %s43 = sphi 0, %s45
      %s46 = sphi 0, %s43
      %s47 = sphi 0, %s46
      %s63 = sphi 0, %s47
      %s67 = sphi 0, %s67
      %s69 = sphi 0, %s67
      %s70 = sphi 0, %s69
      %s84 = sphi 0, %s70
      %s88 = sphi 0, %s88
      %s90 = sphi 0, %s88
      %s91 = sphi 0, %s90
      %s105 = sphi 0, %s91
      %s109 = sphi 0, %s109
      %s111 = sphi 0, %s109
      %s112 = sphi 0, %s111
      %s126 = sphi 0, %s112
      %s130 = sphi 0, %s130
      %s132 = sphi 0, %s130
      %s133 = sphi 0, %s132
      %s147 = sphi 0, %s133
      %s151 = sphi 0, %s151
      %s153 = sphi 0, %s151
      %s154 = sphi 0, %s153
      %s168 = sphi 0, %s154
      %s172 = sphi 0, %s172
      %s174 = sphi 0, %s172
      %s175 = sphi 0, %s174
      %s189 = sphi 0, %s175
      %s197 = sphi 0, %s199
      %s200 = sphi 0, %s197
      %s201 = sphi 0, %s200
      %s217 = sphi 0, %s201
      %s223 = sphi 0, %s225
      %s226 = sphi 0, %s223
      %s227 = sphi 0, %s226
      %s243 = sphi 0, %s227
      %s249 = sphi 0, %s251
      %s252 = sphi 0, %s249
      %s253 = sphi 0, %s252
      %s269 = sphi 0, %s253
    $region4: #{spatial_model_vis_forward.1} parent=1 // loop_header_branch
      %22 = sbr.rel (%p20) target = $region8
    $region5: #{spatial_model_vis_forward.1} parent=1 // loop_body
      %s24 = ssub.s32 %s19, 1
      %s25 = ssub.s32 %s19, 2
      %s32 = sadd.s32 1, %s27
      %p33 = scmp.ge.s32.totalorder %s32, 1
      %s34 = scalar_select %p33, 0, %s32
      %s35 = sadd.s32 1, %s26
      %s36 = scalar_select %p33, %s35, %s26
      %p37 = scmp.ge.s32.totalorder %s36, 2
      %s38 = scalar_select %p37, 0, %s36
      %s39 = ssub.s32 %s26, %s38
      %s40 = ssub.s32 %s27, %s34
      %s41 = sor.u32 %s39, %s40
      %p42 = scmp.eq.s32.totalorder %s41, 0
      %s44 = sadd.s32 %s43, 1
      %s45 = scalar_select %p42, %s43, %s44
      %p48 = pneg %p42
      %p49 = scmp.eq.s32.totalorder %s19, 1
      %p50 = por %p48, %p49
      %p51 = scmp.ne.s32.totalorder %s43, %s46
      %p52 = scmp.eq.s32.totalorder %s19, 0
      %p53 = por %p51, %p52
      %p54 = scmp.ne.s32.totalorder %s43, %s46
      %p55 = scmp.eq.s32.totalorder %s24, 1
      %p56 = por %p54, %p55
      %p57 = scmp.ne.s32.totalorder %s46, %s47
      %p58 = scmp.eq.s32.totalorder %s24, 0
      %p59 = por %p57, %p58
      %p60 = scmp.ne.s32.totalorder %s46, %s47
      %p61 = scmp.eq.s32.totalorder %s25, 1
      %p62 = por %p60, %p61
      %p64 = scmp.ne.s32.totalorder %s47, %s63
      %p65 = scmp.eq.s32.totalorder %s25, 0
      %p66 = por %p64, %p65
      %s68 = sadd.s32 %s67, 1
      %p71 = scmp.eq.s32.totalorder %s19, 1
      %p72 = scmp.ne.s32.totalorder %s67, %s69
      %p73 = scmp.eq.s32.totalorder %s19, 0
      %p74 = por %p72, %p73
      %p75 = scmp.ne.s32.totalorder %s67, %s69
      %p76 = scmp.eq.s32.totalorder %s24, 1
      %p77 = por %p75, %p76
      %p78 = scmp.ne.s32.totalorder %s69, %s70
      %p79 = scmp.eq.s32.totalorder %s24, 0
      %p80 = por %p78, %p79
      %p81 = scmp.ne.s32.totalorder %s69, %s70
      %p82 = scmp.eq.s32.totalorder %s25, 1
      %p83 = por %p81, %p82
      %p85 = scmp.ne.s32.totalorder %s70, %s84
      %p86 = scmp.eq.s32.totalorder %s25, 0
      %p87 = por %p85, %p86
      %s89 = sadd.s32 %s88, 1
      %p92 = scmp.eq.s32.totalorder %s19, 1
      %p93 = scmp.ne.s32.totalorder %s88, %s90
      %p94 = scmp.eq.s32.totalorder %s19, 0
      %p95 = por %p93, %p94
      %p96 = scmp.ne.s32.totalorder %s88, %s90
      %p97 = scmp.eq.s32.totalorder %s24, 1
      %p98 = por %p96, %p97
      %p99 = scmp.ne.s32.totalorder %s90, %s91
      %p100 = scmp.eq.s32.totalorder %s24, 0
      %p101 = por %p99, %p100
      %p102 = scmp.ne.s32.totalorder %s90, %s91
      %p103 = scmp.eq.s32.totalorder %s25, 1
      %p104 = por %p102, %p103
      %p106 = scmp.ne.s32.totalorder %s91, %s105
      %p107 = scmp.eq.s32.totalorder %s25, 0
      %p108 = por %p106, %p107
      %s110 = sadd.s32 %s109, 1
      %p113 = scmp.eq.s32.totalorder %s19, 1
      %p114 = scmp.ne.s32.totalorder %s109, %s111
      %p115 = scmp.eq.s32.totalorder %s19, 0
      %p116 = por %p114, %p115
      %p117 = scmp.ne.s32.totalorder %s109, %s111
      %p118 = scmp.eq.s32.totalorder %s24, 1
      %p119 = por %p117, %p118
      %p120 = scmp.ne.s32.totalorder %s111, %s112
      %p121 = scmp.eq.s32.totalorder %s24, 0
      %p122 = por %p120, %p121
      %p123 = scmp.ne.s32.totalorder %s111, %s112
      %p124 = scmp.eq.s32.totalorder %s25, 1
      %p125 = por %p123, %p124
      %p127 = scmp.ne.s32.totalorder %s112, %s126
      %p128 = scmp.eq.s32.totalorder %s25, 0
      %p129 = por %p127, %p128
      %s131 = sadd.s32 %s130, 1
      %p134 = scmp.eq.s32.totalorder %s19, 1
      %p135 = scmp.ne.s32.totalorder %s130, %s132
      %p136 = scmp.eq.s32.totalorder %s19, 0
      %p137 = por %p135, %p136
      %p138 = scmp.ne.s32.totalorder %s130, %s132
      %p139 = scmp.eq.s32.totalorder %s24, 1
      %p140 = por %p138, %p139
      %p141 = scmp.ne.s32.totalorder %s132, %s133
      %p142 = scmp.eq.s32.totalorder %s24, 0
      %p143 = por %p141, %p142
      %p144 = scmp.ne.s32.totalorder %s132, %s133
      %p145 = scmp.eq.s32.totalorder %s25, 1
      %p146 = por %p144, %p145
      %p148 = scmp.ne.s32.totalorder %s133, %s147
      %p149 = scmp.eq.s32.totalorder %s25, 0
      %p150 = por %p148, %p149
      %s152 = sadd.s32 %s151, 1
      %p155 = scmp.eq.s32.totalorder %s19, 1
      %p156 = scmp.ne.s32.totalorder %s151, %s153
      %p157 = scmp.eq.s32.totalorder %s19, 0
      %p158 = por %p156, %p157
      %p159 = scmp.ne.s32.totalorder %s151, %s153
      %p160 = scmp.eq.s32.totalorder %s24, 1
      %p161 = por %p159, %p160
      %p162 = scmp.ne.s32.totalorder %s153, %s154
      %p163 = scmp.eq.s32.totalorder %s24, 0
      %p164 = por %p162, %p163
      %p165 = scmp.ne.s32.totalorder %s153, %s154
      %p166 = scmp.eq.s32.totalorder %s25, 1
      %p167 = por %p165, %p166
      %p169 = scmp.ne.s32.totalorder %s154, %s168
      %p170 = scmp.eq.s32.totalorder %s25, 0
      %p171 = por %p169, %p170
      %s173 = sadd.s32 %s172, 1
      %p176 = scmp.eq.s32.totalorder %s19, 1
      %p177 = scmp.ne.s32.totalorder %s172, %s174
      %p178 = scmp.eq.s32.totalorder %s19, 0
      %p179 = por %p177, %p178
      %p180 = scmp.ne.s32.totalorder %s172, %s174
      %p181 = scmp.eq.s32.totalorder %s24, 1
      %p182 = por %p180, %p181
      %p183 = scmp.ne.s32.totalorder %s174, %s175
      %p184 = scmp.eq.s32.totalorder %s24, 0
      %p185 = por %p183, %p184
      %p186 = scmp.ne.s32.totalorder %s174, %s175
      %p187 = scmp.eq.s32.totalorder %s25, 1
      %p188 = por %p186, %p187
      %p190 = scmp.ne.s32.totalorder %s175, %s189
      %p191 = scmp.eq.s32.totalorder %s25, 0
      %p192 = por %p190, %p191
      %s193 = ssub.s32 %s26, %s38
      %s194 = ssub.s32 %s27, %s34
      %s195 = sor.u32 %s193, %s194
      %p196 = scmp.eq.s32.totalorder %s195, 0
      %s198 = sadd.s32 %s197, 1
      %s199 = scalar_select %p196, %s197, %s198
      %p202 = pneg %p196
      %p203 = scmp.eq.s32.totalorder %s19, 1
      %p204 = por %p202, %p203
      %p205 = scmp.ne.s32.totalorder %s197, %s200
      %p206 = scmp.eq.s32.totalorder %s19, 0
      %p207 = por %p205, %p206
      %p208 = scmp.ne.s32.totalorder %s197, %s200
      %p209 = scmp.eq.s32.totalorder %s24, 1
      %p210 = por %p208, %p209
      %p211 = scmp.ne.s32.totalorder %s200, %s201
      %p212 = scmp.eq.s32.totalorder %s24, 0
      %p213 = por %p211, %p212
      %p214 = scmp.ne.s32.totalorder %s200, %s201
      %p215 = scmp.eq.s32.totalorder %s25, 1
      %p216 = por %p214, %p215
      %p218 = scmp.ne.s32.totalorder %s201, %s217
      %p219 = scmp.eq.s32.totalorder %s25, 0
      %p220 = por %p218, %p219
      %s221 = ssub.s32 %s26, %s38
      %p222 = scmp.eq.s32.totalorder %s221, 0
      %s224 = sadd.s32 %s223, 1
      %s225 = scalar_select %p222, %s223, %s224
      %p228 = pneg %p222
      %p229 = scmp.eq.s32.totalorder %s19, 1
      %p230 = por %p228, %p229
      %p231 = scmp.ne.s32.totalorder %s223, %s226
      %p232 = scmp.eq.s32.totalorder %s19, 0
      %p233 = por %p231, %p232
      %p234 = scmp.ne.s32.totalorder %s223, %s226
      %p235 = scmp.eq.s32.totalorder %s24, 1
      %p236 = por %p234, %p235
      %p237 = scmp.ne.s32.totalorder %s226, %s227
      %p238 = scmp.eq.s32.totalorder %s24, 0
      %p239 = por %p237, %p238
      %p240 = scmp.ne.s32.totalorder %s226, %s227
      %p241 = scmp.eq.s32.totalorder %s25, 1
      %p242 = por %p240, %p241
      %p244 = scmp.ne.s32.totalorder %s227, %s243
      %p245 = scmp.eq.s32.totalorder %s25, 0
      %p246 = por %p244, %p245
      %s247 = ssub.s32 %s26, %s38
      %p248 = scmp.eq.s32.totalorder %s247, 0
      %s250 = sadd.s32 %s249, 1
      %s251 = scalar_select %p248, %s249, %s250
      %p254 = pneg %p248
      %p255 = scmp.eq.s32.totalorder %s19, 1
      %p256 = por %p254, %p255
      %p257 = scmp.ne.s32.totalorder %s249, %s252
      %p258 = scmp.eq.s32.totalorder %s19, 0
      %p259 = por %p257, %p258
      %p260 = scmp.ne.s32.totalorder %s249, %s252
      %p261 = scmp.eq.s32.totalorder %s24, 1
      %p262 = por %p260, %p261
      %p263 = scmp.ne.s32.totalorder %s252, %s253
      %p264 = scmp.eq.s32.totalorder %s24, 0
      %p265 = por %p263, %p264
      %p266 = scmp.ne.s32.totalorder %s252, %s253
      %p267 = scmp.eq.s32.totalorder %s25, 1
      %p268 = por %p266, %p267
      %p270 = scmp.ne.s32.totalorder %s253, %s269
      %p271 = scmp.eq.s32.totalorder %s25, 0
      %p272 = por %p270, %p271
      %p273 = scmp.le.s32.totalorder 1, %s19
      %p274 = scmp.lt.s32.totalorder %s19, 3
      %p275 = pnand %p273, %p274
      %p276 = pneg %p275
      // Predicated region
      $region9: #{spatial_model_vis_forward.1} parent=5 // pred_check
        _
      $region10: #{spatial_model_vis_forward.1} parent=5 // pred_check_branch
        %278 = sbr.rel (%p275) target = $region12
      $region11: #{spatial_model_vis_forward.1} parent=5 // pred_region
        %s279 = ssub.s32 %s19, 1
        // Predicated region
        $region13: #{spatial_model_vis_forward.1} parent=11 // pred_check
          %p280 = pneg %p80
        $region14: #{spatial_model_vis_forward.1} parent=11 // pred_check_branch
          %282 = sbr.rel (%p280) target = $region16
        $region15: #{spatial_model_vis_forward.1} parent=11 // pred_region
          %s284 = ssub.s32 1024, 1024
          %285 = vsyncadd [#allocation4], %s284
          %s286 = sshll.u32 [#allocation3], 4
          %s287 = int_to_ptr.vmem [resolvable:$true] %s286
          %292 = dma.hbm_to_vmem [thread:$0]  %s1, 1024, %s287, [#allocation4], 64, 64, 4
        $region16: #{spatial_model_vis_forward.1} parent=11 // pred_fallthru
          _
        // Predicated region
        $region17: #{spatial_model_vis_forward.1} parent=11 // pred_check
          %p293 = pneg %p101
        $region18: #{spatial_model_vis_forward.1} parent=11 // pred_check_branch
          %295 = sbr.rel (%p293) target = $region20
        $region19: #{spatial_model_vis_forward.1} parent=11 // pred_region
          _
        $region20: #{spatial_model_vis_forward.1} parent=11 // pred_fallthru
          _
        // Predicated region
        $region21: #{spatial_model_vis_forward.1} parent=11 // pred_check
          %p296 = pneg %p122
        $region22: #{spatial_model_vis_forward.1} parent=11 // pred_check_branch
          %298 = sbr.rel (%p296) target = $region24
        $region23: #{spatial_model_vis_forward.1} parent=11 // pred_region
          %s300 = ssub.s32 1024, 1024
          %301 = vsyncadd [#allocation6], %s300
          %s302 = sshll.u32 [#allocation5], 4
          %s303 = int_to_ptr.vmem [resolvable:$true] %s302
          %308 = dma.hbm_to_vmem [thread:$0]  %s3, 1024, %s303, [#allocation6], 64, 64, 4
        $region24: #{spatial_model_vis_forward.1} parent=11 // pred_fallthru
          _
        // Predicated region
        $region25: #{spatial_model_vis_forward.1} parent=11 // pred_check
          %p309 = pneg %p143
        $region26: #{spatial_model_vis_forward.1} parent=11 // pred_check_branch
          %311 = sbr.rel (%p309) target = $region28
        $region27: #{spatial_model_vis_forward.1} parent=11 // pred_region
          _
        $region28: #{spatial_model_vis_forward.1} parent=11 // pred_fallthru
          _
        // Predicated region
        $region29: #{spatial_model_vis_forward.1} parent=11 // pred_check
          %p312 = pneg %p164
        $region30: #{spatial_model_vis_forward.1} parent=11 // pred_check_branch
          %314 = sbr.rel (%p312) target = $region32
        $region31: #{spatial_model_vis_forward.1} parent=11 // pred_region
          %s316 = ssub.s32 1024, 1024
          %317 = vsyncadd [#allocation6], %s316
          %s318 = sshll.u32 [#allocation7], 4
          %s319 = int_to_ptr.vmem [resolvable:$true] %s318
          %324 = dma.hbm_to_vmem [thread:$0]  %s5, 1024, %s319, [#allocation6], 64, 64, 4
        $region32: #{spatial_model_vis_forward.1} parent=11 // pred_fallthru
          _
        // Predicated region
        $region33: #{spatial_model_vis_forward.1} parent=11 // pred_check
          %p325 = pneg %p185
        $region34: #{spatial_model_vis_forward.1} parent=11 // pred_check_branch
          %327 = sbr.rel (%p325) target = $region36
        $region35: #{spatial_model_vis_forward.1} parent=11 // pred_region
          %s329 = ssub.s32 2048, 2048
          %330 = vsyncadd [#allocation9], %s329
          %s331 = sshll.u32 [#allocation8], 4
          %s332 = int_to_ptr.vmem [resolvable:$true] %s331
          %337 = dma.hbm_to_vmem [thread:$0]  %s6, 2048, %s332, [#allocation9], 128, 128, 8
        $region36: #{spatial_model_vis_forward.1} parent=11 // pred_fallthru
          _
      $region12: #{spatial_model_vis_forward.1} parent=5 // pred_fallthru
        _
      %p338 = scmp.lt.s32.totalorder %s19, 2
      // Predicated region
      $region37: #{spatial_model_vis_forward.1} parent=5 // pred_check
        %p339 = pneg %p338
      $region38: #{spatial_model_vis_forward.1} parent=5 // pred_check_branch
        %341 = sbr.rel (%p339) target = $region40
      $region39: #{spatial_model_vis_forward.1} parent=5 // pred_region
        // Predicated region
        $region41: #{spatial_model_vis_forward.1} parent=39 // pred_check
          %p342 = pneg %p53
        $region42: #{spatial_model_vis_forward.1} parent=39 // pred_check_branch
          %344 = sbr.rel (%p342) target = $region44
        $region43: #{spatial_model_vis_forward.1} parent=39 // pred_region
          %s345 = smul.u32 2, %s27
          %p346 = scmp.lt.s32.totalorder %s26, 1
          %s347 = scalar_select %p346, %s26, 1
          %p348 = scmp.lt.s32.totalorder %s345, 1
          %s349 = scalar_select %p348, %s345, 1
          %s350 = smul.addr %s347, 2
          %s351 = sadd.s32 %s349, %s350
          %s352 = smul.addr %s351, 2
          %s353 = scalar_lea.vmem %s0, %s352
          %s354 = smul.u32 2, %s27
        $region44: #{spatial_model_vis_forward.1} parent=39 // pred_fallthru
          _
      $region40: #{spatial_model_vis_forward.1} parent=5 // pred_fallthru
        _
      %p355 = scmp.le.s32.totalorder 1, %s19
      %p356 = scmp.lt.s32.totalorder %s19, 3
      %p357 = pnand %p355, %p356
      %p358 = pneg %p357
      // Predicated region
      $region45: #{spatial_model_vis_forward.1} parent=5 // pred_check
        _
      $region46: #{spatial_model_vis_forward.1} parent=5 // pred_check_branch
        %360 = sbr.rel (%p357) target = $region48
      $region47: #{spatial_model_vis_forward.1} parent=5 // pred_region
        %s361 = ssub.s32 %s19, 1
        // Predicated region
        $region49: #{spatial_model_vis_forward.1} parent=47 // pred_check
          %p362 = pneg %p80
        $region50: #{spatial_model_vis_forward.1} parent=47 // pred_check_branch
          %364 = sbr.rel (%p362) target = $region52
        $region51: #{spatial_model_vis_forward.1} parent=47 // pred_region
          %365 = dma.done [#allocation4], 1024
        $region52: #{spatial_model_vis_forward.1} parent=47 // pred_fallthru
          _
        // Predicated region
        $region53: #{spatial_model_vis_forward.1} parent=47 // pred_check
          %p366 = pneg %p122
        $region54: #{spatial_model_vis_forward.1} parent=47 // pred_check_branch
          %368 = sbr.rel (%p366) target = $region56
        $region55: #{spatial_model_vis_forward.1} parent=47 // pred_region
          %369 = dma.done [#allocation6], 1024
        $region56: #{spatial_model_vis_forward.1} parent=47 // pred_fallthru
          _
        // Predicated region
        $region57: #{spatial_model_vis_forward.1} parent=47 // pred_check
          %p370 = pneg %p164
        $region58: #{spatial_model_vis_forward.1} parent=47 // pred_check_branch
          %372 = sbr.rel (%p370) target = $region60
        $region59: #{spatial_model_vis_forward.1} parent=47 // pred_region
          %373 = dma.done [#allocation6], 1024
        $region60: #{spatial_model_vis_forward.1} parent=47 // pred_fallthru
          _
        // Predicated region
        $region61: #{spatial_model_vis_forward.1} parent=47 // pred_check
          %p374 = pneg %p185
        $region62: #{spatial_model_vis_forward.1} parent=47 // pred_check_branch
          %376 = sbr.rel (%p374) target = $region64
        $region63: #{spatial_model_vis_forward.1} parent=47 // pred_region
          %377 = dma.done [#allocation9], 2048
        $region64: #{spatial_model_vis_forward.1} parent=47 // pred_fallthru
          _
        %s378 = smul.u32 2, %s29
        %p379 = scmp.lt.s32.totalorder %s28, 1
        %s380 = scalar_select %p379, %s28, 1
        %p381 = scmp.lt.s32.totalorder %s378, 1
        %s382 = scalar_select %p381, %s378, 1
        %s383 = smul.addr %s380, 2
        %s384 = sadd.s32 %s382, %s383
        %s385 = smul.addr %s384, 2
        %s386 = scalar_lea.vmem %s0, %s385
        %p387 = pneg %p59
        %p388 = pneg %p56
        %p389 = pneg %p80
        %p390 = pneg %p77
        %p391 = pneg %p101
        %p392 = pneg %p98
        %p393 = pneg %p122
        %p394 = pneg %p119
        %p395 = pneg %p143
        %p396 = pneg %p140
        %p397 = pneg %p164
        %p398 = pneg %p161
        %p399 = pneg %p185
        %p400 = pneg %p182
        %p401 = pneg %p213
        %p402 = pneg %p210
        %s403 = smul.u32 2, %s29
        %p404 = scmp.lt.s32.totalorder %s28, 1
        %s405 = scalar_select %p404, %s28, 1
        %p406 = scmp.lt.s32.totalorder %s403, 1
        %s407 = scalar_select %p406, %s403, 1
        %s408 = smul.addr %s405, 32
        %s409 = sadd.s32 %s407, %s408
        %s410 = smul.addr %s409, 4
        %s411 = scalar_lea.vmem %s7, %s410
        %p412 = pneg %p239
        %p413 = pneg %p236
        %p414 = scmp.lt.s32.totalorder %s28, 1
        %s415 = scalar_select %p414, %s28, 1
        %s416 = smul.addr %s415, 16
        %s417 = smul.addr %s416, 8
        %s418 = scalar_lea.vmem %s8, %s417
        %p419 = pneg %p265
        %p420 = pneg %p262
        %p421 = scmp.lt.s32.totalorder %s28, 1
        %s422 = scalar_select %p421, %s28, 1
        %s423 = smul.addr %s422, 16
        %s424 = smul.addr %s423, 8
        %s425 = scalar_lea.vmem %s9, %s424
        %s426 = smul.u32 2, %s29
        %p427 = scmp.lt.s32.totalorder %s28, 1
        %s428 = scalar_select %p427, %s28, 1
        %p429 = scmp.lt.s32.totalorder %s426, 1
        %s430 = scalar_select %p429, %s426, 1
        %s431 = smul.addr %s428, 2
        %s432 = sadd.s32 %s430, %s431
        %s433 = smul.addr %s432, 2
        %s434 = scalar_lea.vmem %s0, %s433
        %s435 = smul.u32 2, %s29
        %s436 = smul.u32 2, %s29
        %p437 = scmp.lt.s32.totalorder %s28, 1
        %s438 = scalar_select %p437, %s28, 1
        %p439 = scmp.lt.s32.totalorder %s436, 1
        %s440 = scalar_select %p439, %s436, 1
        %s441 = smul.addr %s438, 32
        %s442 = sadd.s32 %s440, %s441
        %s443 = smul.addr %s442, 4
        %s444 = scalar_lea.vmem %s7, %s443
        %s445 = smul.u32 2, %s29
        %p446 = scmp.lt.s32.totalorder %s28, 1
        %s447 = scalar_select %p446, %s28, 1
        %s448 = smul.addr %s447, 16
        %s449 = smul.addr %s448, 8
        %s450 = scalar_lea.vmem %s8, %s449
        %p451 = scmp.lt.s32.totalorder %s28, 1
        %s452 = scalar_select %p451, %s28, 1
        %s453 = smul.addr %s452, 16
        %s454 = smul.addr %s453, 8
        %s455 = scalar_lea.vmem %s9, %s454
        %p457 = scmp.eq.s32.totalorder %s29, 0
        // Predicated region
        $region65: #{spatial_model_vis_forward.1} parent=47 // pred_check
          %p458 = pneg %p457
        $region66: #{spatial_model_vis_forward.1} parent=47 // pred_check_branch
          %460 = sbr.rel (%p458) target = $region68
        $region67: #{spatial_model_vis_forward.1} parent=47 // pred_region
          %vm461 = vcmask 7168
          %462 = vst.msk [vmem:[#allocation2] sm:$0xff] %vm461, 0.0
          %463 = vst.msk [vmem:[#allocation2 + $0x8] sm:$0xff] %vm461, 0.0
          %464 = vst.msk [vmem:[#allocation2 + $0x10] sm:$0xff] %vm461, 0.0
          %465 = vst.msk [vmem:[#allocation2 + $0x18] sm:$0xff] %vm461, 0.0
          %466 = vst.msk [vmem:[#allocation2 + $0x20] sm:$0xff] %vm461, 0.0
          %467 = vst.msk [vmem:[#allocation2 + $0x28] sm:$0xff] %vm461, 0.0
          %468 = vst.msk [vmem:[#allocation2 + $0x30] sm:$0xff] %vm461, 0.0
          %469 = vst.msk [vmem:[#allocation2 + $0x38] sm:$0xff] %vm461, 0.0
          %470 = vst.msk [vmem:[#allocation2 + $0x40] sm:$0xff] %vm461, 0.0
          %471 = vst.msk [vmem:[#allocation2 + $0x48] sm:$0xff] %vm461, 0.0
          %472 = vst.msk [vmem:[#allocation2 + $0x50] sm:$0xff] %vm461, 0.0
          %473 = vst.msk [vmem:[#allocation2 + $0x58] sm:$0xff] %vm461, 0.0
          %474 = vst.msk [vmem:[#allocation2 + $0x60] sm:$0xff] %vm461, 0.0
          %475 = vst.msk [vmem:[#allocation2 + $0x68] sm:$0xff] %vm461, 0.0
          %476 = vst.msk [vmem:[#allocation2 + $0x70] sm:$0xff] %vm461, 0.0
          %477 = vst.msk [vmem:[#allocation2 + $0x78] sm:$0xff] %vm461, 0.0
        $region68: #{spatial_model_vis_forward.1} parent=47 // pred_fallthru
          _
        %v478 = vld [vmem:[#allocation3] sm:$0xf]
        %v479 = vld [vmem:[#allocation3 + $0x4] sm:$0xf]
        %v480 = vld [vmem:[#allocation3 + $0x8] sm:$0xf]
        %v481 = vld [vmem:[#allocation3 + $0xc] sm:$0xf]
        %v482 = vld [vmem:[#allocation3 + $0x10] sm:$0xf]
        %v483 = vld [vmem:[#allocation3 + $0x14] sm:$0xf]
        %v484 = vld [vmem:[#allocation3 + $0x18] sm:$0xf]
        %v485 = vld [vmem:[#allocation3 + $0x1c] sm:$0xf]
        %v486 = vld [vmem:[#allocation3 + $0x20] sm:$0xf]
        %v487 = vld [vmem:[#allocation3 + $0x24] sm:$0xf]
        %v488 = vld [vmem:[#allocation3 + $0x28] sm:$0xf]
        %v489 = vld [vmem:[#allocation3 + $0x2c] sm:$0xf]
        %v490 = vld [vmem:[#allocation3 + $0x30] sm:$0xf]
        %v491 = vld [vmem:[#allocation3 + $0x34] sm:$0xf]
        %v492 = vld [vmem:[#allocation3 + $0x38] sm:$0xf]
        %v493 = vld [vmem:[#allocation3 + $0x3c] sm:$0xf]
        %v494 = vld [vmem:[%s434] sm:$0xf]
        %v495 = vld [vmem:[%s2] sm:$0xff]
        %v496 = vld [vmem:[%s2 + $0x8] sm:$0xff]
        %v497 = vld [vmem:[%s2 + $0x10] sm:$0xff]
        %v498 = vld [vmem:[%s2 + $0x18] sm:$0xff]
        %v499 = vld [vmem:[%s2 + $0x20] sm:$0xff]
        %v500 = vld [vmem:[%s2 + $0x28] sm:$0xff]
        %v501 = vld [vmem:[%s2 + $0x30] sm:$0xff]
        %v502 = vld [vmem:[%s2 + $0x38] sm:$0xff]
        %v503 = vld [vmem:[%s2 + $0x40] sm:$0xff]
        %v504 = vld [vmem:[%s2 + $0x48] sm:$0xff]
        %v505 = vld [vmem:[%s2 + $0x50] sm:$0xff]
        %v506 = vld [vmem:[%s2 + $0x58] sm:$0xff]
        %v507 = vld [vmem:[%s2 + $0x60] sm:$0xff]
        %v508 = vld [vmem:[%s2 + $0x68] sm:$0xff]
        %v509 = vld [vmem:[%s2 + $0x70] sm:$0xff]
        %v510 = vld [vmem:[%s2 + $0x78] sm:$0xff]
        %512 = vset.pattern.permute.xlu0 0
        %513 = vperm.xlu0 %512, %v495
        %v514 = vpop.permute.xlu0 %513
        %517 = vset.pattern.permute.xlu0 0
        %518 = vperm.xlu0 %517, %v496
        %v519 = vpop.permute.xlu0 %518
        %522 = vset.pattern.permute.xlu0 0
        %523 = vperm.xlu0 %522, %v497
        %v524 = vpop.permute.xlu0 %523
        %527 = vset.pattern.permute.xlu0 0
        %528 = vperm.xlu0 %527, %v498
        %v529 = vpop.permute.xlu0 %528
        %532 = vset.pattern.permute.xlu0 0
        %533 = vperm.xlu0 %532, %v499
        %v534 = vpop.permute.xlu0 %533
        %537 = vset.pattern.permute.xlu0 0
        %538 = vperm.xlu0 %537, %v500
        %v539 = vpop.permute.xlu0 %538
        %542 = vset.pattern.permute.xlu0 0
        %543 = vperm.xlu0 %542, %v501
        %v544 = vpop.permute.xlu0 %543
        %547 = vset.pattern.permute.xlu0 0
        %548 = vperm.xlu0 %547, %v502
        %v549 = vpop.permute.xlu0 %548
        %552 = vset.pattern.permute.xlu0 0
        %553 = vperm.xlu0 %552, %v503
        %v554 = vpop.permute.xlu0 %553
        %557 = vset.pattern.permute.xlu0 0
        %558 = vperm.xlu0 %557, %v504
        %v559 = vpop.permute.xlu0 %558
        %562 = vset.pattern.permute.xlu0 0
        %563 = vperm.xlu0 %562, %v505
        %v564 = vpop.permute.xlu0 %563
        %567 = vset.pattern.permute.xlu0 0
        %568 = vperm.xlu0 %567, %v506
        %v569 = vpop.permute.xlu0 %568
        %572 = vset.pattern.permute.xlu0 0
        %573 = vperm.xlu0 %572, %v507
        %v574 = vpop.permute.xlu0 %573
        %577 = vset.pattern.permute.xlu0 0
        %578 = vperm.xlu0 %577, %v508
        %v579 = vpop.permute.xlu0 %578
        %582 = vset.pattern.permute.xlu0 0
        %583 = vperm.xlu0 %582, %v509
        %v584 = vpop.permute.xlu0 %583
        %587 = vset.pattern.permute.xlu0 0
        %588 = vperm.xlu0 %587, %v510
        %v589 = vpop.permute.xlu0 %588
        %v607 = vunpack.c.l.b16 %v478
        %v608 = vunpack.c.l.b16 %v479
        %v609 = vunpack.c.l.b16 %v480
        %v610 = vunpack.c.l.b16 %v481
        %v611 = vunpack.c.l.b16 %v482
        %v612 = vunpack.c.l.b16 %v483
        %v613 = vunpack.c.l.b16 %v484
        %v614 = vunpack.c.l.b16 %v485
        %v615 = vunpack.c.l.b16 %v486
        %v616 = vunpack.c.l.b16 %v487
        %v617 = vunpack.c.l.b16 %v488
        %v618 = vunpack.c.l.b16 %v489
        %v619 = vunpack.c.l.b16 %v490
        %v620 = vunpack.c.l.b16 %v491
        %v621 = vunpack.c.l.b16 %v492
        %v622 = vunpack.c.l.b16 %v493
        %v623 = vpack.c.b16 %v608, %v607
        %v624 = vpack.c.b16 %v610, %v609
        %v625 = vpack.c.b16 %v612, %v611
        %v626 = vpack.c.b16 %v614, %v613
        %v627 = vpack.c.b16 %v616, %v615
        %v628 = vpack.c.b16 %v618, %v617
        %v629 = vpack.c.b16 %v620, %v619
        %v630 = vpack.c.b16 %v622, %v621
        %v633 = vunpack.c.l.s4 1983009808
        %v634 = vunpack.c.0.s8 %v633
        %v635 = vlaneseq
        %v636 = vshrl.u32 %v635, 7
        %v637 = vsub.s32 %v634, %v636
        %v638 = vrot.slane %v494, %v637
        %v639 = vcombine.high %v638, %v638
        %vm640 = vcmask 31744
        %v642 = vsel %vm640, %v623, 0
        %v645 = vsel %vm640, %v624, 0
        %v648 = vsel %vm640, %v625, 0
        %v651 = vsel %vm640, %v626, 0
        %v654 = vsel %vm640, %v627, 0
        %v657 = vsel %vm640, %v628, 0
        %v660 = vsel %vm640, %v629, 0
        %v663 = vsel %vm640, %v630, 0
        %vm665 = vcmask 1041408
        %v667 = vsel %vm665, %v638, 0
        %v670 = vsel %vm665, %v639, 0
        %672 = vmatprep.subr.bf16.mxu0 0
        %673 = vmatpush1.bf16.msra.mxu0 0
        %674 = vmatprep.subr.bf16.mxu0 0
        %675 = vmatpush1.bf16.msra.mxu0 0
        %676 = vmatprep.subr.bf16.mxu0 0
        %677 = vmatpush1.bf16.msra.mxu0 0
        %678 = vmatprep.subr.bf16.mxu0 0
        %679 = vmatpush1.bf16.msra.mxu0 0
        %680 = vmatprep.subr.bf16.mxu0 0
        %681 = vmatpush1.bf16.msra.mxu0 0
        %682 = vmatprep.subr.bf16.mxu0 0
        %683 = vmatpush1.bf16.msra.mxu0 0
        %684 = vmatprep.subr.bf16.mxu0 0
        %685 = vmatpush1.bf16.msra.mxu0 0
        %686 = vmatprep.subr.bf16.mxu0 %v670
        %687 = vmatpush1.bf16.msra.mxu0 %v667
        %688 = vmatprep.subr.bf16.mxu0 0
        %689 = vmatpush2.bf16.msra.mxu0 0
        %690 = vmatprep.subr.bf16.mxu0 0
        %691 = vmatpush2.bf16.msra.mxu0 0
        %692 = vmatprep.subr.bf16.mxu0 0
        %693 = vmatpush2.bf16.msra.mxu0 0
        %694 = vmatprep.subr.bf16.mxu0 0
        %695 = vmatpush2.bf16.msra.mxu0 0
        %696 = vmatprep.subr.bf16.mxu0 0
        %697 = vmatpush2.bf16.msra.mxu0 0
        %698 = vmatprep.subr.bf16.mxu0 0
        %699 = vmatpush2.bf16.msra.mxu0 0
        %700 = vmatprep.subr.bf16.mxu0 0
        %701 = vmatpush2.bf16.msra.mxu0 0
        %702 = vmatprep.subr.bf16.mxu0 0
        %703 = vmatpush2.bf16.msra.mxu0 0
        %704 = vmatprep.mubr.bf16.mxu0 0
        %705 = vmatmul.mubr.bf16.gmra.mxu0 %v642
        %v706 = vpop.f32.mrf.mxu0
        %v707 = vadd.f32 %v514, %v706
        %v708 = vpop.f32.mrf.mxu0
        %v709 = vadd.f32 %v514, %v708
        %v710 = vpop.f32.mrf.mxu0
        %v711 = vadd.f32 %v519, %v710
        %v712 = vpop.f32.mrf.mxu0
        %v713 = vadd.f32 %v519, %v712
        %714 = vmatprep.mubr.bf16.mxu0 0
        %715 = vmatmul.mubr.bf16.gmra.mxu0 %v645
        %v716 = vpop.f32.mrf.mxu0
        %v717 = vadd.f32 %v524, %v716
        %v718 = vpop.f32.mrf.mxu0
        %v719 = vadd.f32 %v524, %v718
        %v720 = vpop.f32.mrf.mxu0
        %v721 = vadd.f32 %v529, %v720
        %v722 = vpop.f32.mrf.mxu0
        %v723 = vadd.f32 %v529, %v722
        %724 = vmatprep.mubr.bf16.mxu0 0
        %725 = vmatmul.mubr.bf16.gmra.mxu0 %v648
        %v726 = vpop.f32.mrf.mxu0
        %v727 = vadd.f32 %v534, %v726
        %v728 = vpop.f32.mrf.mxu0
        %v729 = vadd.f32 %v534, %v728
        %v730 = vpop.f32.mrf.mxu0
        %v731 = vadd.f32 %v539, %v730
        %v732 = vpop.f32.mrf.mxu0
        %v733 = vadd.f32 %v539, %v732
        %734 = vmatprep.mubr.bf16.mxu0 0
        %735 = vmatmul.mubr.bf16.gmra.mxu0 %v651
        %v736 = vpop.f32.mrf.mxu0
        %v737 = vadd.f32 %v544, %v736
        %v738 = vpop.f32.mrf.mxu0
        %v739 = vadd.f32 %v544, %v738
        %v740 = vpop.f32.mrf.mxu0
        %v741 = vadd.f32 %v549, %v740
        %v742 = vpop.f32.mrf.mxu0
        %v743 = vadd.f32 %v549, %v742
        %744 = vmatprep.mubr.bf16.mxu0 0
        %745 = vmatmul.mubr.bf16.gmra.mxu0 %v654
        %v746 = vpop.f32.mrf.mxu0
        %v747 = vadd.f32 %v554, %v746
        %v748 = vpop.f32.mrf.mxu0
        %v749 = vadd.f32 %v554, %v748
        %v750 = vpop.f32.mrf.mxu0
        %v751 = vadd.f32 %v559, %v750
        %v752 = vpop.f32.mrf.mxu0
        %v753 = vadd.f32 %v559, %v752
        %754 = vmatprep.mubr.bf16.mxu0 0
        %755 = vmatmul.mubr.bf16.gmra.mxu0 %v657
        %v756 = vpop.f32.mrf.mxu0
        %v757 = vadd.f32 %v564, %v756
        %v758 = vpop.f32.mrf.mxu0
        %v759 = vadd.f32 %v564, %v758
        %v760 = vpop.f32.mrf.mxu0
        %v761 = vadd.f32 %v569, %v760
        %v762 = vpop.f32.mrf.mxu0
        %v763 = vadd.f32 %v569, %v762
        %764 = vmatprep.mubr.bf16.mxu0 0
        %765 = vmatmul.mubr.bf16.gmra.mxu0 %v660
        %v766 = vpop.f32.mrf.mxu0
        %v767 = vadd.f32 %v574, %v766
        %v768 = vpop.f32.mrf.mxu0
        %v769 = vadd.f32 %v574, %v768
        %v770 = vpop.f32.mrf.mxu0
        %v771 = vadd.f32 %v579, %v770
        %v772 = vpop.f32.mrf.mxu0
        %v773 = vadd.f32 %v579, %v772
        %774 = vmatprep.mubr.bf16.mxu0 0
        %775 = vmatmul.mubr.bf16.gmra.mxu0 %v663
        %v776 = vpop.f32.mrf.mxu0
        %v777 = vadd.f32 %v584, %v776
        %v778 = vpop.f32.mrf.mxu0
        %v779 = vadd.f32 %v584, %v778
        %v780 = vpop.f32.mrf.mxu0
        %v781 = vadd.f32 %v589, %v780
        %v782 = vpop.f32.mrf.mxu0
        %v783 = vadd.f32 %v589, %v782
        %784 = vdwg.mxu0
        %v785 = vmax.f32 %v707, 0.0
        %v786 = vmax.f32 %v709, 0.0
        %v787 = vmax.f32 %v711, 0.0
        %v788 = vmax.f32 %v713, 0.0
        %v789 = vmax.f32 %v717, 0.0
        %v790 = vmax.f32 %v719, 0.0
        %v791 = vmax.f32 %v721, 0.0
        %v792 = vmax.f32 %v723, 0.0
        %v793 = vmax.f32 %v727, 0.0
        %v794 = vmax.f32 %v729, 0.0
        %v795 = vmax.f32 %v731, 0.0
        %v796 = vmax.f32 %v733, 0.0
        %v797 = vmax.f32 %v737, 0.0
        %v798 = vmax.f32 %v739, 0.0
        %v799 = vmax.f32 %v741, 0.0
        %v800 = vmax.f32 %v743, 0.0
        %v801 = vmax.f32 %v747, 0.0
        %v802 = vmax.f32 %v749, 0.0
        %v803 = vmax.f32 %v751, 0.0
        %v804 = vmax.f32 %v753, 0.0
        %v805 = vmax.f32 %v757, 0.0
        %v806 = vmax.f32 %v759, 0.0
        %v807 = vmax.f32 %v761, 0.0
        %v808 = vmax.f32 %v763, 0.0
        %v809 = vmax.f32 %v767, 0.0
        %v810 = vmax.f32 %v769, 0.0
        %v811 = vmax.f32 %v771, 0.0
        %v812 = vmax.f32 %v773, 0.0
        %v813 = vmax.f32 %v777, 0.0
        %v814 = vmax.f32 %v779, 0.0
        %v815 = vmax.f32 %v781, 0.0
        %v816 = vmax.f32 %v783, 0.0
        %v817 = vpack.c.bf16 %v787, %v785
        %v818 = vpack.c.bf16 %v788, %v786
        %v819 = vpack.c.bf16 %v791, %v789
        %v820 = vpack.c.bf16 %v792, %v790
        %v821 = vpack.c.bf16 %v795, %v793
        %v822 = vpack.c.bf16 %v796, %v794
        %v823 = vpack.c.bf16 %v799, %v797
        %v824 = vpack.c.bf16 %v800, %v798
        %v825 = vpack.c.bf16 %v803, %v801
        %v826 = vpack.c.bf16 %v804, %v802
        %v827 = vpack.c.bf16 %v807, %v805
        %v828 = vpack.c.bf16 %v808, %v806
        %v829 = vpack.c.bf16 %v811, %v809
        %v830 = vpack.c.bf16 %v812, %v810
        %v831 = vpack.c.bf16 %v815, %v813
        %v832 = vpack.c.bf16 %v816, %v814
        %v849 = vunpack.c.l.b16 %v817
        %v850 = vunpack.c.l.b16 %v818
        %v851 = vunpack.c.h.b16 %v817
        %v852 = vunpack.c.h.b16 %v818
        %v853 = vunpack.c.l.b16 %v819
        %v854 = vunpack.c.l.b16 %v820
        %v855 = vunpack.c.h.b16 %v819
        %v856 = vunpack.c.h.b16 %v820
        %v857 = vunpack.c.l.b16 %v821
        %v858 = vunpack.c.l.b16 %v822
        %v859 = vunpack.c.h.b16 %v821
        %v860 = vunpack.c.h.b16 %v822
        %v861 = vunpack.c.l.b16 %v823
        %v862 = vunpack.c.l.b16 %v824
        %v863 = vunpack.c.h.b16 %v823
        %v864 = vunpack.c.h.b16 %v824
        %v865 = vunpack.c.l.b16 %v825
        %v866 = vunpack.c.l.b16 %v826
        %v867 = vunpack.c.h.b16 %v825
        %v868 = vunpack.c.h.b16 %v826
        %v869 = vunpack.c.l.b16 %v827
        %v870 = vunpack.c.l.b16 %v828
        %v871 = vunpack.c.h.b16 %v827
        %v872 = vunpack.c.h.b16 %v828
        %v873 = vunpack.c.l.b16 %v829
        %v874 = vunpack.c.l.b16 %v830
        %v875 = vunpack.c.h.b16 %v829
        %v876 = vunpack.c.h.b16 %v830
        %v877 = vunpack.c.l.b16 %v831
        %v878 = vunpack.c.l.b16 %v832
        %v879 = vunpack.c.h.b16 %v831
        %v880 = vunpack.c.h.b16 %v832
        %v881 = vpack.c.b16 %v850, %v849
        %v882 = vpack.c.b16 %v852, %v851
        %v883 = vpack.c.b16 %v854, %v853
        %v884 = vpack.c.b16 %v856, %v855
        %v885 = vpack.c.b16 %v858, %v857
        %v886 = vpack.c.b16 %v860, %v859
        %v887 = vpack.c.b16 %v862, %v861
        %v888 = vpack.c.b16 %v864, %v863
        %v889 = vpack.c.b16 %v866, %v865
        %v890 = vpack.c.b16 %v868, %v867
        %v891 = vpack.c.b16 %v870, %v869
        %v892 = vpack.c.b16 %v872, %v871
        %v893 = vpack.c.b16 %v874, %v873
        %v894 = vpack.c.b16 %v876, %v875
        %v895 = vpack.c.b16 %v878, %v877
        %v896 = vpack.c.b16 %v880, %v879
        %913 = vst [vmem:[%s444] sm:$0xff] %v881
        %914 = vst [vmem:[%s444 + $0x8] sm:$0xff] %v882
        %915 = vst [vmem:[%s444 + $0x10] sm:$0xff] %v883
        %916 = vst [vmem:[%s444 + $0x18] sm:$0xff] %v884
        %917 = vst [vmem:[%s444 + $0x20] sm:$0xff] %v885
        %918 = vst [vmem:[%s444 + $0x28] sm:$0xff] %v886
        %919 = vst [vmem:[%s444 + $0x30] sm:$0xff] %v887
        %920 = vst [vmem:[%s444 + $0x38] sm:$0xff] %v888
        %921 = vst [vmem:[%s444 + $0x40] sm:$0xff] %v889
        %922 = vst [vmem:[%s444 + $0x48] sm:$0xff] %v890
        %923 = vst [vmem:[%s444 + $0x50] sm:$0xff] %v891
        %924 = vst [vmem:[%s444 + $0x58] sm:$0xff] %v892
        %925 = vst [vmem:[%s444 + $0x60] sm:$0xff] %v893
        %926 = vst [vmem:[%s444 + $0x68] sm:$0xff] %v894
        %927 = vst [vmem:[%s444 + $0x70] sm:$0xff] %v895
        %928 = vst [vmem:[%s444 + $0x78] sm:$0xff] %v896
        %v929 = vld [vmem:[#allocation2] sm:$0xff]
        %v930 = vld [vmem:[#allocation2 + $0x8] sm:$0xff]
        %v931 = vld [vmem:[#allocation2 + $0x10] sm:$0xff]
        %v932 = vld [vmem:[#allocation2 + $0x18] sm:$0xff]
        %v933 = vld [vmem:[#allocation2 + $0x20] sm:$0xff]
        %v934 = vld [vmem:[#allocation2 + $0x28] sm:$0xff]
        %v935 = vld [vmem:[#allocation2 + $0x30] sm:$0xff]
        %v936 = vld [vmem:[#allocation2 + $0x38] sm:$0xff]
        %v937 = vld [vmem:[#allocation2 + $0x40] sm:$0xff]
        %v938 = vld [vmem:[#allocation2 + $0x48] sm:$0xff]
        %v939 = vld [vmem:[#allocation2 + $0x50] sm:$0xff]
        %v940 = vld [vmem:[#allocation2 + $0x58] sm:$0xff]
        %v941 = vld [vmem:[#allocation2 + $0x60] sm:$0xff]
        %v942 = vld [vmem:[#allocation2 + $0x68] sm:$0xff]
        %v943 = vld [vmem:[#allocation2 + $0x70] sm:$0xff]
        %v944 = vld [vmem:[#allocation2 + $0x78] sm:$0xff]
        %v945 = vadd.f32 %v785, %v786
        %946 = vadd.xlane.f32.xlu0 %v945
        %v947 = vpop.xlane.xlu0 %946
        %v948 = vadd.f32 %v787, %v788
        %949 = vadd.xlane.f32.xlu0 %v948
        %v950 = vpop.xlane.xlu0 %949
        %v951 = vadd.f32 %v789, %v790
        %952 = vadd.xlane.f32.xlu0 %v951
        %v953 = vpop.xlane.xlu0 %952
        %v954 = vadd.f32 %v791, %v792
        %955 = vadd.xlane.f32.xlu0 %v954
        %v956 = vpop.xlane.xlu0 %955
        %v957 = vadd.f32 %v793, %v794
        %958 = vadd.xlane.f32.xlu0 %v957
        %v959 = vpop.xlane.xlu0 %958
        %v960 = vadd.f32 %v795, %v796
        %961 = vadd.xlane.f32.xlu0 %v960
        %v962 = vpop.xlane.xlu0 %961
        %v963 = vadd.f32 %v797, %v798
        %964 = vadd.xlane.f32.xlu0 %v963
        %v965 = vpop.xlane.xlu0 %964
        %v966 = vadd.f32 %v799, %v800
        %967 = vadd.xlane.f32.xlu0 %v966
        %v968 = vpop.xlane.xlu0 %967
        %v969 = vadd.f32 %v801, %v802
        %970 = vadd.xlane.f32.xlu0 %v969
        %v971 = vpop.xlane.xlu0 %970
        %v972 = vadd.f32 %v803, %v804
        %973 = vadd.xlane.f32.xlu0 %v972
        %v974 = vpop.xlane.xlu0 %973
        %v975 = vadd.f32 %v805, %v806
        %976 = vadd.xlane.f32.xlu0 %v975
        %v977 = vpop.xlane.xlu0 %976
        %v978 = vadd.f32 %v807, %v808
        %979 = vadd.xlane.f32.xlu0 %v978
        %v980 = vpop.xlane.xlu0 %979
        %v981 = vadd.f32 %v809, %v810
        %982 = vadd.xlane.f32.xlu0 %v981
        %v983 = vpop.xlane.xlu0 %982
        %v984 = vadd.f32 %v811, %v812
        %985 = vadd.xlane.f32.xlu0 %v984
        %v986 = vpop.xlane.xlu0 %985
        %v987 = vadd.f32 %v813, %v814
        %988 = vadd.xlane.f32.xlu0 %v987
        %v989 = vpop.xlane.xlu0 %988
        %v990 = vadd.f32 %v815, %v816
        %991 = vadd.xlane.f32.xlu0 %v990
        %v992 = vpop.xlane.xlu0 %991
        %v993 = vadd.f32 %v929, %v947
        %v994 = vadd.f32 %v930, %v950
        %v995 = vadd.f32 %v931, %v953
        %v996 = vadd.f32 %v932, %v956
        %v997 = vadd.f32 %v933, %v959
        %v998 = vadd.f32 %v934, %v962
        %v999 = vadd.f32 %v935, %v965
        %v1000 = vadd.f32 %v936, %v968
        %v1001 = vadd.f32 %v937, %v971
        %v1002 = vadd.f32 %v938, %v974
        %v1003 = vadd.f32 %v939, %v977
        %v1004 = vadd.f32 %v940, %v980
        %v1005 = vadd.f32 %v941, %v983
        %v1006 = vadd.f32 %v942, %v986
        %v1007 = vadd.f32 %v943, %v989
        %v1008 = vadd.f32 %v944, %v992
        %vm1009 = vcmask 7168
        %1010 = vst.msk [vmem:[#allocation2] sm:$0xff] %vm1009, %v993
        %1011 = vst.msk [vmem:[#allocation2 + $0x8] sm:$0xff] %vm1009, %v994
        %1012 = vst.msk [vmem:[#allocation2 + $0x10] sm:$0xff] %vm1009, %v995
        %1013 = vst.msk [vmem:[#allocation2 + $0x18] sm:$0xff] %vm1009, %v996
        %1014 = vst.msk [vmem:[#allocation2 + $0x20] sm:$0xff] %vm1009, %v997
        %1015 = vst.msk [vmem:[#allocation2 + $0x28] sm:$0xff] %vm1009, %v998
        %1016 = vst.msk [vmem:[#allocation2 + $0x30] sm:$0xff] %vm1009, %v999
        %1017 = vst.msk [vmem:[#allocation2 + $0x38] sm:$0xff] %vm1009, %v1000
        %1018 = vst.msk [vmem:[#allocation2 + $0x40] sm:$0xff] %vm1009, %v1001
        %1019 = vst.msk [vmem:[#allocation2 + $0x48] sm:$0xff] %vm1009, %v1002
        %1020 = vst.msk [vmem:[#allocation2 + $0x50] sm:$0xff] %vm1009, %v1003
        %1021 = vst.msk [vmem:[#allocation2 + $0x58] sm:$0xff] %vm1009, %v1004
        %1022 = vst.msk [vmem:[#allocation2 + $0x60] sm:$0xff] %vm1009, %v1005
        %1023 = vst.msk [vmem:[#allocation2 + $0x68] sm:$0xff] %vm1009, %v1006
        %1024 = vst.msk [vmem:[#allocation2 + $0x70] sm:$0xff] %vm1009, %v1007
        %1025 = vst.msk [vmem:[#allocation2 + $0x78] sm:$0xff] %vm1009, %v1008
        // Predicated region
        $region69: #{spatial_model_vis_forward.1} parent=47 // pred_check
          %p1026 = pneg %p457
        $region70: #{spatial_model_vis_forward.1} parent=47 // pred_check_branch
          %1028 = sbr.rel (%p1026) target = $region72
        $region71: #{spatial_model_vis_forward.1} parent=47 // pred_region
          %v1029 = vld [vmem:[#allocation2] sm:$0xff]
          %v1030 = vld [vmem:[#allocation2 + $0x8] sm:$0xff]
          %v1031 = vld [vmem:[#allocation2 + $0x10] sm:$0xff]
          %v1032 = vld [vmem:[#allocation2 + $0x18] sm:$0xff]
          %v1033 = vld [vmem:[#allocation2 + $0x20] sm:$0xff]
          %v1034 = vld [vmem:[#allocation2 + $0x28] sm:$0xff]
          %v1035 = vld [vmem:[#allocation2 + $0x30] sm:$0xff]
          %v1036 = vld [vmem:[#allocation2 + $0x38] sm:$0xff]
          %v1037 = vld [vmem:[#allocation2 + $0x40] sm:$0xff]
          %v1038 = vld [vmem:[#allocation2 + $0x48] sm:$0xff]
          %v1039 = vld [vmem:[#allocation2 + $0x50] sm:$0xff]
          %v1040 = vld [vmem:[#allocation2 + $0x58] sm:$0xff]
          %v1041 = vld [vmem:[#allocation2 + $0x60] sm:$0xff]
          %v1042 = vld [vmem:[#allocation2 + $0x68] sm:$0xff]
          %v1043 = vld [vmem:[#allocation2 + $0x70] sm:$0xff]
          %v1044 = vld [vmem:[#allocation2 + $0x78] sm:$0xff]
          %v1045 = vmul.f32 %v1029, 0.00390625
          %v1046 = vmul.f32 %v1030, 0.00390625
          %v1047 = vmul.f32 %v1031, 0.00390625
          %v1048 = vmul.f32 %v1032, 0.00390625
          %v1049 = vmul.f32 %v1033, 0.00390625
          %v1050 = vmul.f32 %v1034, 0.00390625
          %v1051 = vmul.f32 %v1035, 0.00390625
          %v1052 = vmul.f32 %v1036, 0.00390625
          %v1053 = vmul.f32 %v1037, 0.00390625
          %v1054 = vmul.f32 %v1038, 0.00390625
          %v1055 = vmul.f32 %v1039, 0.00390625
          %v1056 = vmul.f32 %v1040, 0.00390625
          %v1057 = vmul.f32 %v1041, 0.00390625
          %v1058 = vmul.f32 %v1042, 0.00390625
          %v1059 = vmul.f32 %v1043, 0.00390625
          %v1060 = vmul.f32 %v1044, 0.00390625
          %1061 = vst.msk [vmem:[%s450] sm:$0xff] %vm1009, %v1045
          %1062 = vst.msk [vmem:[%s450 + $0x8] sm:$0xff] %vm1009, %v1046
          %1063 = vst.msk [vmem:[%s450 + $0x10] sm:$0xff] %vm1009, %v1047
          %1064 = vst.msk [vmem:[%s450 + $0x18] sm:$0xff] %vm1009, %v1048
          %1065 = vst.msk [vmem:[%s450 + $0x20] sm:$0xff] %vm1009, %v1049
          %1066 = vst.msk [vmem:[%s450 + $0x28] sm:$0xff] %vm1009, %v1050
          %1067 = vst.msk [vmem:[%s450 + $0x30] sm:$0xff] %vm1009, %v1051
          %1068 = vst.msk [vmem:[%s450 + $0x38] sm:$0xff] %vm1009, %v1052
          %1069 = vst.msk [vmem:[%s450 + $0x40] sm:$0xff] %vm1009, %v1053
          %1070 = vst.msk [vmem:[%s450 + $0x48] sm:$0xff] %vm1009, %v1054
          %1071 = vst.msk [vmem:[%s450 + $0x50] sm:$0xff] %vm1009, %v1055
          %1072 = vst.msk [vmem:[%s450 + $0x58] sm:$0xff] %vm1009, %v1056
          %1073 = vst.msk [vmem:[%s450 + $0x60] sm:$0xff] %vm1009, %v1057
          %1074 = vst.msk [vmem:[%s450 + $0x68] sm:$0xff] %vm1009, %v1058
          %1075 = vst.msk [vmem:[%s450 + $0x70] sm:$0xff] %vm1009, %v1059
          %1076 = vst.msk [vmem:[%s450 + $0x78] sm:$0xff] %vm1009, %v1060
          %v1077 = vld [vmem:[#allocation5] sm:$0xf]
          %v1078 = vld [vmem:[#allocation5 + $0x4] sm:$0xf]
          %v1079 = vld [vmem:[#allocation5 + $0x8] sm:$0xf]
          %v1080 = vld [vmem:[#allocation5 + $0xc] sm:$0xf]
          %v1081 = vld [vmem:[#allocation5 + $0x10] sm:$0xf]
          %v1082 = vld [vmem:[#allocation5 + $0x14] sm:$0xf]
          %v1083 = vld [vmem:[#allocation5 + $0x18] sm:$0xf]
          %v1084 = vld [vmem:[#allocation5 + $0x1c] sm:$0xf]
          %v1085 = vld [vmem:[#allocation5 + $0x20] sm:$0xf]
          %v1086 = vld [vmem:[#allocation5 + $0x24] sm:$0xf]
          %v1087 = vld [vmem:[#allocation5 + $0x28] sm:$0xf]
          %v1088 = vld [vmem:[#allocation5 + $0x2c] sm:$0xf]
          %v1089 = vld [vmem:[#allocation5 + $0x30] sm:$0xf]
          %v1090 = vld [vmem:[#allocation5 + $0x34] sm:$0xf]
          %v1091 = vld [vmem:[#allocation5 + $0x38] sm:$0xf]
          %v1092 = vld [vmem:[#allocation5 + $0x3c] sm:$0xf]
          %v1093 = vpack.c.bf16 %v1046, %v1045
          %v1094 = vpack.c.bf16 %v1048, %v1047
          %v1095 = vpack.c.bf16 %v1050, %v1049
          %v1096 = vpack.c.bf16 %v1052, %v1051
          %v1097 = vpack.c.bf16 %v1054, %v1053
          %v1098 = vpack.c.bf16 %v1056, %v1055
          %v1099 = vpack.c.bf16 %v1058, %v1057
          %v1100 = vpack.c.bf16 %v1060, %v1059
          %v1101 = vld [vmem:[%s4] sm:$0xff]
          %v1102 = vld [vmem:[%s4 + $0x8] sm:$0xff]
          %v1103 = vld [vmem:[%s4 + $0x10] sm:$0xff]
          %v1104 = vld [vmem:[%s4 + $0x18] sm:$0xff]
          %v1105 = vld [vmem:[%s4 + $0x20] sm:$0xff]
          %v1106 = vld [vmem:[%s4 + $0x28] sm:$0xff]
          %v1107 = vld [vmem:[%s4 + $0x30] sm:$0xff]
          %v1108 = vld [vmem:[%s4 + $0x38] sm:$0xff]
          %v1109 = vld [vmem:[%s4 + $0x40] sm:$0xff]
          %v1110 = vld [vmem:[%s4 + $0x48] sm:$0xff]
          %v1111 = vld [vmem:[%s4 + $0x50] sm:$0xff]
          %v1112 = vld [vmem:[%s4 + $0x58] sm:$0xff]
          %v1113 = vld [vmem:[%s4 + $0x60] sm:$0xff]
          %v1114 = vld [vmem:[%s4 + $0x68] sm:$0xff]
          %v1115 = vld [vmem:[%s4 + $0x70] sm:$0xff]
          %v1116 = vld [vmem:[%s4 + $0x78] sm:$0xff]
          %v1133 = vunpack.c.l.b16 %v1077
          %v1134 = vunpack.c.l.b16 %v1078
          %v1135 = vunpack.c.l.b16 %v1079
          %v1136 = vunpack.c.l.b16 %v1080
          %v1137 = vunpack.c.l.b16 %v1081
          %v1138 = vunpack.c.l.b16 %v1082
          %v1139 = vunpack.c.l.b16 %v1083
          %v1140 = vunpack.c.l.b16 %v1084
          %v1141 = vunpack.c.l.b16 %v1085
          %v1142 = vunpack.c.l.b16 %v1086
          %v1143 = vunpack.c.l.b16 %v1087
          %v1144 = vunpack.c.l.b16 %v1088
          %v1145 = vunpack.c.l.b16 %v1089
          %v1146 = vunpack.c.l.b16 %v1090
          %v1147 = vunpack.c.l.b16 %v1091
          %v1148 = vunpack.c.l.b16 %v1092
          %v1149 = vpack.c.b16 %v1134, %v1133
          %v1150 = vpack.c.b16 %v1136, %v1135
          %v1151 = vpack.c.b16 %v1138, %v1137
          %v1152 = vpack.c.b16 %v1140, %v1139
          %v1153 = vpack.c.b16 %v1142, %v1141
          %v1154 = vpack.c.b16 %v1144, %v1143
          %v1155 = vpack.c.b16 %v1146, %v1145
          %v1156 = vpack.c.b16 %v1148, %v1147
          %1165 = vmatprep.subr.bf16.mxu0 0
          %1166 = vmatpush1.bf16.msra.mxu0 %v1100
          %1167 = vmatprep.subr.bf16.mxu0 0
          %1168 = vmatpush1.bf16.msra.mxu0 %v1099
          %1169 = vmatprep.subr.bf16.mxu0 0
          %1170 = vmatpush1.bf16.msra.mxu0 %v1098
          %1171 = vmatprep.subr.bf16.mxu0 0
          %1172 = vmatpush1.bf16.msra.mxu0 %v1097
          %1173 = vmatprep.subr.bf16.mxu0 0
          %1174 = vmatpush1.bf16.msra.mxu0 %v1096
          %1175 = vmatprep.subr.bf16.mxu0 0
          %1176 = vmatpush1.bf16.msra.mxu0 %v1095
          %1177 = vmatprep.subr.bf16.mxu0 0
          %1178 = vmatpush1.bf16.msra.mxu0 %v1094
          %1179 = vmatprep.subr.bf16.mxu0 0
          %1180 = vmatpush1.bf16.msra.mxu0 %v1093
          %1181 = vmatprep.subr.bf16.mxu0 0
          %1182 = vmatpush2.bf16.msra.mxu0 0
          %1183 = vmatprep.subr.bf16.mxu0 0
          %1184 = vmatpush2.bf16.msra.mxu0 0
          %1185 = vmatprep.subr.bf16.mxu0 0
          %1186 = vmatpush2.bf16.msra.mxu0 0
          %1187 = vmatprep.subr.bf16.mxu0 0
          %1188 = vmatpush2.bf16.msra.mxu0 0
          %1189 = vmatprep.subr.bf16.mxu0 0
          %1190 = vmatpush2.bf16.msra.mxu0 0
          %1191 = vmatprep.subr.bf16.mxu0 0
          %1192 = vmatpush2.bf16.msra.mxu0 0
          %1193 = vmatprep.subr.bf16.mxu0 0
          %1194 = vmatpush2.bf16.msra.mxu0 0
          %1195 = vmatprep.subr.bf16.mxu0 0
          %1196 = vmatpush2.bf16.msra.mxu0 0
          %1197 = vmatprep.mubr.bf16.mxu0 0
          %1198 = vmatmul.mubr.bf16.gmra.mxu0 %v1149
          %v1199 = vpop.f32.mrf.mxu0
          %v1200 = vadd.f32 %v1101, %v1199
          %v1201 = vpop.f32.mrf.mxu0
          %v1202 = vpop.f32.mrf.mxu0
          %v1203 = vadd.f32 %v1102, %v1202
          %v1204 = vpop.f32.mrf.mxu0
          %1205 = vmatprep.mubr.bf16.mxu0 0
          %1206 = vmatmul.mubr.bf16.gmra.mxu0 %v1150
          %v1207 = vpop.f32.mrf.mxu0
          %v1208 = vadd.f32 %v1103, %v1207
          %v1209 = vpop.f32.mrf.mxu0
          %v1210 = vpop.f32.mrf.mxu0
          %v1211 = vadd.f32 %v1104, %v1210
          %v1212 = vpop.f32.mrf.mxu0
          %1213 = vmatprep.mubr.bf16.mxu0 0
          %1214 = vmatmul.mubr.bf16.gmra.mxu0 %v1151
          %v1215 = vpop.f32.mrf.mxu0
          %v1216 = vadd.f32 %v1105, %v1215
          %v1217 = vpop.f32.mrf.mxu0
          %v1218 = vpop.f32.mrf.mxu0
          %v1219 = vadd.f32 %v1106, %v1218
          %v1220 = vpop.f32.mrf.mxu0
          %1221 = vmatprep.mubr.bf16.mxu0 0
          %1222 = vmatmul.mubr.bf16.gmra.mxu0 %v1152
          %v1223 = vpop.f32.mrf.mxu0
          %v1224 = vadd.f32 %v1107, %v1223
          %v1225 = vpop.f32.mrf.mxu0
          %v1226 = vpop.f32.mrf.mxu0
          %v1227 = vadd.f32 %v1108, %v1226
          %v1228 = vpop.f32.mrf.mxu0
          %1229 = vmatprep.mubr.bf16.mxu0 0
          %1230 = vmatmul.mubr.bf16.gmra.mxu0 %v1153
          %v1231 = vpop.f32.mrf.mxu0
          %v1232 = vadd.f32 %v1109, %v1231
          %v1233 = vpop.f32.mrf.mxu0
          %v1234 = vpop.f32.mrf.mxu0
          %v1235 = vadd.f32 %v1110, %v1234
          %v1236 = vpop.f32.mrf.mxu0
          %1237 = vmatprep.mubr.bf16.mxu0 0
          %1238 = vmatmul.mubr.bf16.gmra.mxu0 %v1154
          %v1239 = vpop.f32.mrf.mxu0
          %v1240 = vadd.f32 %v1111, %v1239
          %v1241 = vpop.f32.mrf.mxu0
          %v1242 = vpop.f32.mrf.mxu0
          %v1243 = vadd.f32 %v1112, %v1242
          %v1244 = vpop.f32.mrf.mxu0
          %1245 = vmatprep.mubr.bf16.mxu0 0
          %1246 = vmatmul.mubr.bf16.gmra.mxu0 %v1155
          %v1247 = vpop.f32.mrf.mxu0
          %v1248 = vadd.f32 %v1113, %v1247
          %v1249 = vpop.f32.mrf.mxu0
          %v1250 = vpop.f32.mrf.mxu0
          %v1251 = vadd.f32 %v1114, %v1250
          %v1252 = vpop.f32.mrf.mxu0
          %1253 = vmatprep.mubr.bf16.mxu0 0
          %1254 = vmatmul.mubr.bf16.gmra.mxu0 %v1156
          %v1255 = vpop.f32.mrf.mxu0
          %v1256 = vadd.f32 %v1115, %v1255
          %v1257 = vpop.f32.mrf.mxu0
          %v1258 = vpop.f32.mrf.mxu0
          %v1259 = vadd.f32 %v1116, %v1258
          %v1260 = vpop.f32.mrf.mxu0
          %1261 = vdwg.mxu0
          %v1262 = vmax.f32 %v1200, 0.0
          %v1263 = vmax.f32 %v1203, 0.0
          %v1264 = vmax.f32 %v1208, 0.0
          %v1265 = vmax.f32 %v1211, 0.0
          %v1266 = vmax.f32 %v1216, 0.0
          %v1267 = vmax.f32 %v1219, 0.0
          %v1268 = vmax.f32 %v1224, 0.0
          %v1269 = vmax.f32 %v1227, 0.0
          %v1270 = vmax.f32 %v1232, 0.0
          %v1271 = vmax.f32 %v1235, 0.0
          %v1272 = vmax.f32 %v1240, 0.0
          %v1273 = vmax.f32 %v1243, 0.0
          %v1274 = vmax.f32 %v1248, 0.0
          %v1275 = vmax.f32 %v1251, 0.0
          %v1276 = vmax.f32 %v1256, 0.0
          %v1277 = vmax.f32 %v1259, 0.0
          %v1278 = vld [vmem:[#allocation7] sm:$0xf]
          %v1279 = vld [vmem:[#allocation7 + $0x4] sm:$0xf]
          %v1280 = vld [vmem:[#allocation7 + $0x8] sm:$0xf]
          %v1281 = vld [vmem:[#allocation7 + $0xc] sm:$0xf]
          %v1282 = vld [vmem:[#allocation7 + $0x10] sm:$0xf]
          %v1283 = vld [vmem:[#allocation7 + $0x14] sm:$0xf]
          %v1284 = vld [vmem:[#allocation7 + $0x18] sm:$0xf]
          %v1285 = vld [vmem:[#allocation7 + $0x1c] sm:$0xf]
          %v1286 = vld [vmem:[#allocation7 + $0x20] sm:$0xf]
          %v1287 = vld [vmem:[#allocation7 + $0x24] sm:$0xf]
          %v1288 = vld [vmem:[#allocation7 + $0x28] sm:$0xf]
          %v1289 = vld [vmem:[#allocation7 + $0x2c] sm:$0xf]
          %v1290 = vld [vmem:[#allocation7 + $0x30] sm:$0xf]
          %v1291 = vld [vmem:[#allocation7 + $0x34] sm:$0xf]
          %v1292 = vld [vmem:[#allocation7 + $0x38] sm:$0xf]
          %v1293 = vld [vmem:[#allocation7 + $0x3c] sm:$0xf]
          %v1294 = vpack.c.bf16 %v1263, %v1262
          %v1295 = vpack.c.bf16 %v1265, %v1264
          %v1296 = vpack.c.bf16 %v1267, %v1266
          %v1297 = vpack.c.bf16 %v1269, %v1268
          %v1298 = vpack.c.bf16 %v1271, %v1270
          %v1299 = vpack.c.bf16 %v1273, %v1272
          %v1300 = vpack.c.bf16 %v1275, %v1274
          %v1301 = vpack.c.bf16 %v1277, %v1276
          %v1302 = vld [vmem:[#allocation8] sm:$0xff]
          %v1303 = vld [vmem:[#allocation8 + $0x8] sm:$0xff]
          %v1304 = vld [vmem:[#allocation8 + $0x10] sm:$0xff]
          %v1305 = vld [vmem:[#allocation8 + $0x18] sm:$0xff]
          %v1306 = vld [vmem:[#allocation8 + $0x20] sm:$0xff]
          %v1307 = vld [vmem:[#allocation8 + $0x28] sm:$0xff]
          %v1308 = vld [vmem:[#allocation8 + $0x30] sm:$0xff]
          %v1309 = vld [vmem:[#allocation8 + $0x38] sm:$0xff]
          %v1310 = vld [vmem:[#allocation8 + $0x40] sm:$0xff]
          %v1311 = vld [vmem:[#allocation8 + $0x48] sm:$0xff]
          %v1312 = vld [vmem:[#allocation8 + $0x50] sm:$0xff]
          %v1313 = vld [vmem:[#allocation8 + $0x58] sm:$0xff]
          %v1314 = vld [vmem:[#allocation8 + $0x60] sm:$0xff]
          %v1315 = vld [vmem:[#allocation8 + $0x68] sm:$0xff]
          %v1316 = vld [vmem:[#allocation8 + $0x70] sm:$0xff]
          %v1317 = vld [vmem:[#allocation8 + $0x78] sm:$0xff]
          %v1334 = vunpack.c.l.b16 %v1278
          %v1335 = vunpack.c.l.b16 %v1279
          %v1336 = vunpack.c.l.b16 %v1280
          %v1337 = vunpack.c.l.b16 %v1281
          %v1338 = vunpack.c.l.b16 %v1282
          %v1339 = vunpack.c.l.b16 %v1283
          %v1340 = vunpack.c.l.b16 %v1284
          %v1341 = vunpack.c.l.b16 %v1285
          %v1342 = vunpack.c.l.b16 %v1286
          %v1343 = vunpack.c.l.b16 %v1287
          %v1344 = vunpack.c.l.b16 %v1288
          %v1345 = vunpack.c.l.b16 %v1289
          %v1346 = vunpack.c.l.b16 %v1290
          %v1347 = vunpack.c.l.b16 %v1291
          %v1348 = vunpack.c.l.b16 %v1292
          %v1349 = vunpack.c.l.b16 %v1293
          %v1350 = vpack.c.b16 %v1335, %v1334
          %v1351 = vpack.c.b16 %v1337, %v1336
          %v1352 = vpack.c.b16 %v1339, %v1338
          %v1353 = vpack.c.b16 %v1341, %v1340
          %v1354 = vpack.c.b16 %v1343, %v1342
          %v1355 = vpack.c.b16 %v1345, %v1344
          %v1356 = vpack.c.b16 %v1347, %v1346
          %v1357 = vpack.c.b16 %v1349, %v1348
          %1366 = vmatprep.subr.bf16.mxu0 0
          %1367 = vmatpush1.bf16.msra.mxu0 %v1301
          %1368 = vmatprep.subr.bf16.mxu0 0
          %1369 = vmatpush1.bf16.msra.mxu0 %v1300
          %1370 = vmatprep.subr.bf16.mxu0 0
          %1371 = vmatpush1.bf16.msra.mxu0 %v1299
          %1372 = vmatprep.subr.bf16.mxu0 0
          %1373 = vmatpush1.bf16.msra.mxu0 %v1298
          %1374 = vmatprep.subr.bf16.mxu0 0
          %1375 = vmatpush1.bf16.msra.mxu0 %v1297
          %1376 = vmatprep.subr.bf16.mxu0 0
          %1377 = vmatpush1.bf16.msra.mxu0 %v1296
          %1378 = vmatprep.subr.bf16.mxu0 0
          %1379 = vmatpush1.bf16.msra.mxu0 %v1295
          %1380 = vmatprep.subr.bf16.mxu0 0
          %1381 = vmatpush1.bf16.msra.mxu0 %v1294
          %1382 = vmatprep.subr.bf16.mxu0 0
          %1383 = vmatpush2.bf16.msra.mxu0 0
          %1384 = vmatprep.subr.bf16.mxu0 0
          %1385 = vmatpush2.bf16.msra.mxu0 0
          %1386 = vmatprep.subr.bf16.mxu0 0
          %1387 = vmatpush2.bf16.msra.mxu0 0
          %1388 = vmatprep.subr.bf16.mxu0 0
          %1389 = vmatpush2.bf16.msra.mxu0 0
          %1390 = vmatprep.subr.bf16.mxu0 0
          %1391 = vmatpush2.bf16.msra.mxu0 0
          %1392 = vmatprep.subr.bf16.mxu0 0
          %1393 = vmatpush2.bf16.msra.mxu0 0
          %1394 = vmatprep.subr.bf16.mxu0 0
          %1395 = vmatpush2.bf16.msra.mxu0 0
          %1396 = vmatprep.subr.bf16.mxu0 0
          %1397 = vmatpush2.bf16.msra.mxu0 0
          %1398 = vmatprep.mubr.bf16.mxu0 0
          %1399 = vmatmul.mubr.bf16.gmra.mxu0 %v1350
          %v1400 = vpop.f32.mrf.mxu0
          %v1401 = vadd.f32 %v1302, %v1400
          %v1402 = vpop.f32.mrf.mxu0
          %v1403 = vpop.f32.mrf.mxu0
          %v1404 = vadd.f32 %v1303, %v1403
          %v1405 = vpop.f32.mrf.mxu0
          %1406 = vmatprep.mubr.bf16.mxu0 0
          %1407 = vmatmul.mubr.bf16.gmra.mxu0 %v1351
          %v1408 = vpop.f32.mrf.mxu0
          %v1409 = vadd.f32 %v1304, %v1408
          %v1410 = vpop.f32.mrf.mxu0
          %v1411 = vpop.f32.mrf.mxu0
          %v1412 = vadd.f32 %v1305, %v1411
          %v1413 = vpop.f32.mrf.mxu0
          %1414 = vmatprep.mubr.bf16.mxu0 0
          %1415 = vmatmul.mubr.bf16.gmra.mxu0 %v1352
          %v1416 = vpop.f32.mrf.mxu0
          %v1417 = vadd.f32 %v1306, %v1416
          %v1418 = vpop.f32.mrf.mxu0
          %v1419 = vpop.f32.mrf.mxu0
          %v1420 = vadd.f32 %v1307, %v1419
          %v1421 = vpop.f32.mrf.mxu0
          %1422 = vmatprep.mubr.bf16.mxu0 0
          %1423 = vmatmul.mubr.bf16.gmra.mxu0 %v1353
          %v1424 = vpop.f32.mrf.mxu0
          %v1425 = vadd.f32 %v1308, %v1424
          %v1426 = vpop.f32.mrf.mxu0
          %v1427 = vpop.f32.mrf.mxu0
          %v1428 = vadd.f32 %v1309, %v1427
          %v1429 = vpop.f32.mrf.mxu0
          %1430 = vmatprep.mubr.bf16.mxu0 0
          %1431 = vmatmul.mubr.bf16.gmra.mxu0 %v1354
          %v1432 = vpop.f32.mrf.mxu0
          %v1433 = vadd.f32 %v1310, %v1432
          %v1434 = vpop.f32.mrf.mxu0
          %v1435 = vpop.f32.mrf.mxu0
          %v1436 = vadd.f32 %v1311, %v1435
          %v1437 = vpop.f32.mrf.mxu0
          %1438 = vmatprep.mubr.bf16.mxu0 0
          %1439 = vmatmul.mubr.bf16.gmra.mxu0 %v1355
          %v1440 = vpop.f32.mrf.mxu0
          %v1441 = vadd.f32 %v1312, %v1440
          %v1442 = vpop.f32.mrf.mxu0
          %v1443 = vpop.f32.mrf.mxu0
          %v1444 = vadd.f32 %v1313, %v1443
          %v1445 = vpop.f32.mrf.mxu0
          %1446 = vmatprep.mubr.bf16.mxu0 0
          %1447 = vmatmul.mubr.bf16.gmra.mxu0 %v1356
          %v1448 = vpop.f32.mrf.mxu0
          %v1449 = vadd.f32 %v1314, %v1448
          %v1450 = vpop.f32.mrf.mxu0
          %v1451 = vpop.f32.mrf.mxu0
          %v1452 = vadd.f32 %v1315, %v1451
          %v1453 = vpop.f32.mrf.mxu0
          %1454 = vmatprep.mubr.bf16.mxu0 0
          %1455 = vmatmul.mubr.bf16.gmra.mxu0 %v1357
          %v1456 = vpop.f32.mrf.mxu0
          %v1457 = vadd.f32 %v1316, %v1456
          %v1458 = vpop.f32.mrf.mxu0
          %v1459 = vpop.f32.mrf.mxu0
          %v1460 = vadd.f32 %v1317, %v1459
          %v1461 = vpop.f32.mrf.mxu0
          %1462 = vdwg.mxu0
          %v1463 = vmul.f32 %v1401, %v1401
          %v1464 = vmul.f32 %v1404, %v1404
          %v1465 = vmul.f32 %v1409, %v1409
          %v1466 = vmul.f32 %v1412, %v1412
          %v1467 = vmul.f32 %v1417, %v1417
          %v1468 = vmul.f32 %v1420, %v1420
          %v1469 = vmul.f32 %v1425, %v1425
          %v1470 = vmul.f32 %v1428, %v1428
          %v1471 = vmul.f32 %v1433, %v1433
          %v1472 = vmul.f32 %v1436, %v1436
          %v1473 = vmul.f32 %v1441, %v1441
          %v1474 = vmul.f32 %v1444, %v1444
          %v1475 = vmul.f32 %v1449, %v1449
          %v1476 = vmul.f32 %v1452, %v1452
          %v1477 = vmul.f32 %v1457, %v1457
          %v1478 = vmul.f32 %v1460, %v1460
          %v1479 = vsel %vm1009, %v1463, 0.0
          %v1480 = vsel %vm1009, %v1464, 0.0
          %v1481 = vadd.f32 %v1479, %v1480
          %v1482 = vsel %vm1009, %v1465, 0.0
          %v1483 = vadd.f32 %v1481, %v1482
          %v1484 = vsel %vm1009, %v1466, 0.0
          %v1485 = vadd.f32 %v1483, %v1484
          %v1486 = vsel %vm1009, %v1467, 0.0
          %v1487 = vadd.f32 %v1485, %v1486
          %v1488 = vsel %vm1009, %v1468, 0.0
          %v1489 = vadd.f32 %v1487, %v1488
          %v1490 = vsel %vm1009, %v1469, 0.0
          %v1491 = vadd.f32 %v1489, %v1490
          %v1492 = vsel %vm1009, %v1470, 0.0
          %v1493 = vadd.f32 %v1491, %v1492
          %v1494 = vsel %vm1009, %v1471, 0.0
          %v1495 = vadd.f32 %v1493, %v1494
          %v1496 = vsel %vm1009, %v1472, 0.0
          %v1497 = vadd.f32 %v1495, %v1496
          %v1498 = vsel %vm1009, %v1473, 0.0
          %v1499 = vadd.f32 %v1497, %v1498
          %v1500 = vsel %vm1009, %v1474, 0.0
          %v1501 = vadd.f32 %v1499, %v1500
          %v1502 = vsel %vm1009, %v1475, 0.0
          %v1503 = vadd.f32 %v1501, %v1502
          %v1504 = vsel %vm1009, %v1476, 0.0
          %v1505 = vadd.f32 %v1503, %v1504
          %v1506 = vsel %vm1009, %v1477, 0.0
          %v1507 = vadd.f32 %v1505, %v1506
          %v1508 = vsel %vm1009, %v1478, 0.0
          %v1509 = vadd.f32 %v1507, %v1508
          %v1510 = vrot.slane %v1509, 4
          %v1511 = vadd.f32 %v1509, %v1510
          %v1512 = vrot.slane %v1511, 2
          %v1513 = vadd.f32 %v1511, %v1512
          %v1514 = vrot.slane %v1513, 1
          %v1515 = vadd.f32 %v1513, %v1514
          %v1516 = vmax.f32 %v1515, 1e-24
          %v1517 = vrsqrt.pop %v1516
          %v1518 = vmul.f32 %v1401, %v1517
          %v1519 = vmul.f32 %v1404, %v1517
          %v1520 = vmul.f32 %v1409, %v1517
          %v1521 = vmul.f32 %v1412, %v1517
          %v1522 = vmul.f32 %v1417, %v1517
          %v1523 = vmul.f32 %v1420, %v1517
          %v1524 = vmul.f32 %v1425, %v1517
          %v1525 = vmul.f32 %v1428, %v1517
          %v1526 = vmul.f32 %v1433, %v1517
          %v1527 = vmul.f32 %v1436, %v1517
          %v1528 = vmul.f32 %v1441, %v1517
          %v1529 = vmul.f32 %v1444, %v1517
          %v1530 = vmul.f32 %v1449, %v1517
          %v1531 = vmul.f32 %v1452, %v1517
          %v1532 = vmul.f32 %v1457, %v1517
          %v1533 = vmul.f32 %v1460, %v1517
          %1534 = vst.msk [vmem:[%s455] sm:$0xff] %vm1009, %v1518
          %1535 = vst.msk [vmem:[%s455 + $0x8] sm:$0xff] %vm1009, %v1519
          %1536 = vst.msk [vmem:[%s455 + $0x10] sm:$0xff] %vm1009, %v1520
          %1537 = vst.msk [vmem:[%s455 + $0x18] sm:$0xff] %vm1009, %v1521
          %1538 = vst.msk [vmem:[%s455 + $0x20] sm:$0xff] %vm1009, %v1522
          %1539 = vst.msk [vmem:[%s455 + $0x28] sm:$0xff] %vm1009, %v1523
          %1540 = vst.msk [vmem:[%s455 + $0x30] sm:$0xff] %vm1009, %v1524
          %1541 = vst.msk [vmem:[%s455 + $0x38] sm:$0xff] %vm1009, %v1525
          %1542 = vst.msk [vmem:[%s455 + $0x40] sm:$0xff] %vm1009, %v1526
          %1543 = vst.msk [vmem:[%s455 + $0x48] sm:$0xff] %vm1009, %v1527
          %1544 = vst.msk [vmem:[%s455 + $0x50] sm:$0xff] %vm1009, %v1528
          %1545 = vst.msk [vmem:[%s455 + $0x58] sm:$0xff] %vm1009, %v1529
          %1546 = vst.msk [vmem:[%s455 + $0x60] sm:$0xff] %vm1009, %v1530
          %1547 = vst.msk [vmem:[%s455 + $0x68] sm:$0xff] %vm1009, %v1531
          %1548 = vst.msk [vmem:[%s455 + $0x70] sm:$0xff] %vm1009, %v1532
          %1549 = vst.msk [vmem:[%s455 + $0x78] sm:$0xff] %vm1009, %v1533
        $region72: #{spatial_model_vis_forward.1} parent=47 // pred_fallthru
          _
        %s1550 = smul.u32 2, %s29
        %p1551 = scmp.lt.s32.totalorder %s28, 1
        %s1552 = scalar_select %p1551, %s28, 1
        %p1553 = scmp.lt.s32.totalorder %s1550, 1
        %s1554 = scalar_select %p1553, %s1550, 1
        %s1555 = smul.addr %s1552, 32
        %s1556 = sadd.s32 %s1554, %s1555
        %s1557 = smul.addr %s1556, 4
        %s1558 = scalar_lea.vmem %s7, %s1557
        %p1559 = scmp.lt.s32.totalorder %s28, 1
        %s1560 = scalar_select %p1559, %s28, 1
        %s1561 = smul.addr %s1560, 16
        %s1562 = smul.addr %s1561, 8
        %s1563 = scalar_lea.vmem %s8, %s1562
        %p1564 = scmp.lt.s32.totalorder %s28, 1
        %s1565 = scalar_select %p1564, %s28, 1
        %s1566 = smul.addr %s1565, 16
        %s1567 = smul.addr %s1566, 8
        %s1568 = scalar_lea.vmem %s9, %s1567
        // Predicated region
        $region73: #{spatial_model_vis_forward.1} parent=47 // pred_check
          %p1569 = pneg %p210
        $region74: #{spatial_model_vis_forward.1} parent=47 // pred_check_branch
          %1571 = sbr.rel (%p1569) target = $region76
        $region75: #{spatial_model_vis_forward.1} parent=47 // pred_region
          %s1572 = smul.u32 2, %s29
        $region76: #{spatial_model_vis_forward.1} parent=47 // pred_fallthru
          _
        // Predicated region
        $region77: #{spatial_model_vis_forward.1} parent=47 // pred_check
          %p1573 = pneg %p236
        $region78: #{spatial_model_vis_forward.1} parent=47 // pred_check_branch
          %1575 = sbr.rel (%p1573) target = $region80
        $region79: #{spatial_model_vis_forward.1} parent=47 // pred_region
          _
        $region80: #{spatial_model_vis_forward.1} parent=47 // pred_fallthru
          _
        // Predicated region
        $region81: #{spatial_model_vis_forward.1} parent=47 // pred_check
          %p1576 = pneg %p262
        $region82: #{spatial_model_vis_forward.1} parent=47 // pred_check_branch
          %1578 = sbr.rel (%p1576) target = $region84
        $region83: #{spatial_model_vis_forward.1} parent=47 // pred_region
          _
        $region84: #{spatial_model_vis_forward.1} parent=47 // pred_fallthru
          _
      $region48: #{spatial_model_vis_forward.1} parent=5 // pred_fallthru
        _
      %p1579 = scmp.le.s32.totalorder 2, %s19
      // Predicated region
      $region85: #{spatial_model_vis_forward.1} parent=5 // pred_check
        %p1580 = pneg %p1579
      $region86: #{spatial_model_vis_forward.1} parent=5 // pred_check_branch
        %1582 = sbr.rel (%p1580) target = $region88
      $region87: #{spatial_model_vis_forward.1} parent=5 // pred_region
        %s1583 = ssub.s32 %s19, 2
        // Predicated region
        $region89: #{spatial_model_vis_forward.1} parent=87 // pred_check
          %p1584 = pneg %p216
        $region90: #{spatial_model_vis_forward.1} parent=87 // pred_check_branch
          %1586 = sbr.rel (%p1584) target = $region92
        $region91: #{spatial_model_vis_forward.1} parent=87 // pred_region
          %s1587 = smul.u32 2, %s31
          %p1588 = scmp.lt.s32.totalorder %s30, 1
          %s1589 = scalar_select %p1588, %s30, 1
          %p1590 = scmp.lt.s32.totalorder %s1587, 1
          %s1591 = scalar_select %p1590, %s1587, 1
          %s1592 = smul.addr %s1589, 32
          %s1593 = sadd.s32 %s1591, %s1592
          %s1594 = smul.addr %s1593, 4
          %s1595 = scalar_lea.vmem %s7, %s1594
        $region92: #{spatial_model_vis_forward.1} parent=87 // pred_fallthru
          _
        // Predicated region
        $region93: #{spatial_model_vis_forward.1} parent=87 // pred_check
          %p1596 = pneg %p242
        $region94: #{spatial_model_vis_forward.1} parent=87 // pred_check_branch
          %1598 = sbr.rel (%p1596) target = $region96
        $region95: #{spatial_model_vis_forward.1} parent=87 // pred_region
          %p1599 = scmp.lt.s32.totalorder %s30, 1
          %s1600 = scalar_select %p1599, %s30, 1
          %s1601 = smul.addr %s1600, 16
          %s1602 = smul.addr %s1601, 8
          %s1603 = scalar_lea.vmem %s8, %s1602
        $region96: #{spatial_model_vis_forward.1} parent=87 // pred_fallthru
          _
        // Predicated region
        $region97: #{spatial_model_vis_forward.1} parent=87 // pred_check
          %p1604 = pneg %p268
        $region98: #{spatial_model_vis_forward.1} parent=87 // pred_check_branch
          %1606 = sbr.rel (%p1604) target = $region100
        $region99: #{spatial_model_vis_forward.1} parent=87 // pred_region
          %p1607 = scmp.lt.s32.totalorder %s30, 1
          %s1608 = scalar_select %p1607, %s30, 1
          %s1609 = smul.addr %s1608, 16
          %s1610 = smul.addr %s1609, 8
          %s1611 = scalar_lea.vmem %s9, %s1610
        $region100: #{spatial_model_vis_forward.1} parent=87 // pred_fallthru
          _
      $region88: #{spatial_model_vis_forward.1} parent=5 // pred_fallthru
        _
    $region6: #{spatial_model_vis_forward.1} parent=1 // loop_footer
      %s23 = sadd.s32 1, %s19
    $region7: #{spatial_model_vis_forward.1} parent=1 // loop_footer_branch
      %18 = sbr.rel target = $region3
    $region8: #{spatial_model_vis_forward.1} parent=1 // loop_exit
      _
    %1612 = vsyncpa [#allocation4], 1
    %s1613 = scalar_lea.sflag [#allocation4], 1
    %1614 = vsyncpa %s1613, 1
    %1615 = vsyncpa [#allocation6], 1
    %1616 = vsyncpa [#allocation9], 1

</llo_original>
